<compile_context>
chip_gen: v7x
topology: tpu7x:2x2x1
jax: 0.10.0
libtpu: 0.0.40
codegen_flags: <defaults>
</compile_context>

<pallas_src>
import jax
import jax.numpy as jnp
from jax.experimental import pallas as pl
from jax.experimental.pallas import tpu as pltpu

C1, C2, C3 = 32, 64, 128     # conv1 channels, conv2 channels, dense1 width (module-fixed)
BN_EPS = 1e-5                # PyTorch BatchNorm1d default eps


# ----------------------------------------------------------------------------- kernel
def _make_kernel(batch, n_features):
    B, F = batch, n_features
    R = B * F                                  # rows, feature-major: r = f*B + b

    def _prev(a):                              # a[r] -> a[r-B] (feature f-1), zero at f==0
        return jnp.concatenate(
            [jnp.zeros((B, a.shape[1]), a.dtype), a[: R - B, :]], axis=0)

    def _next(a):                              # a[r] -> a[r+B] (feature f+1), zero at f==F-1
        return jnp.concatenate(
            [a[B:, :], jnp.zeros((B, a.shape[1]), a.dtype)], axis=0)

    def kernel(x_ref, c1w_ref, c1b_ref, s1_ref, t1_ref,
               c2w_ref, c2b_ref, s2_ref, t2_ref,
               w1p_ref, bd1_ref, s3_ref, t3_ref,
               wo_ref, bo_ref, o_ref):
        x = x_ref[...].astype(jnp.float32)                           # (R, 1)

        # ---- conv1 (Cin=1, k=3, pad=1) as broadcast MACs, then ReLU, then BN1 ----
        h = (_prev(x) * c1w_ref[0:1, :]
             + x * c1w_ref[1:2, :]
             + _next(x) * c1w_ref[2:3, :]
             + c1b_ref[...])                                         # (R, 32)
        h = jnp.maximum(h, 0.0)
        h = h * s1_ref[...] + t1_ref[...]

        # ---- conv2 (32->64, k=3, pad=1) as 3 shifted matmuls, ReLU, BN2 ----
        g = (jnp.dot(_prev(h), c2w_ref[0], preferred_element_type=jnp.float32)
             + jnp.dot(h, c2w_ref[1], preferred_element_type=jnp.float32)
             + jnp.dot(_next(h), c2w_ref[2], preferred_element_type=jnp.float32)
             + c2b_ref[...])                                         # (R, 64)
        g = jnp.maximum(g, 0.0)
        g = g * s2_ref[...] + t2_ref[...]

        # ---- flatten (c*F+f order pre-folded into w1p) + dense1, ReLU, BN3 ----
        acc = jnp.zeros((B, C3), jnp.float32) + bd1_ref[...]         # (B, 128)
        for f in range(F):                                           # static unroll
            acc = acc + jnp.dot(g[f * B:(f + 1) * B, :], w1p_ref[f],
                                preferred_element_type=jnp.float32)
        d = jnp.maximum(acc, 0.0)
        d = d * s3_ref[...] + t3_ref[...]
        # TODO(synk): nn.Dropout(p=0.3) is identity here (eval-mode semantics).

        # ---- output layer: Linear(128, 1) ----
        out = jnp.dot(d, wo_ref[...], preferred_element_type=jnp.float32) + bo_ref[...]
        o_ref[...] = out.astype(o_ref.dtype)                         # (B, 1)

    return kernel


# ----------------------------------------------------------------------------- wrapper
def cnn_model_forward(x, params):
    """x: (B, n_features) float32. params: PyTorch-layout weights (see init_params)."""
    B, F = x.shape
    R = B * F

    def bn_fold(pfx, c):
        s = params[pfx + "_g"] / jnp.sqrt(params[pfx + "_v"] + BN_EPS)
        t = params[pfx + "_b"] - params[pfx + "_m"] * s
        return s.reshape(1, c), t.reshape(1, c)

    s1, t1 = bn_fold("bn1", C1)
    s2, t2 = bn_fold("bn2", C2)
    s3, t3 = bn_fold("bn3", C3)

    # feature-major activation rows: r = f*B + b
    x_k = x.T.reshape(R, 1)

    c1w = jnp.transpose(params["conv1_w"][:, 0, :], (1, 0))          # (3, 32)      [tap, co]
    c1b = params["conv1_b"].reshape(1, C1)
    c2w = jnp.transpose(params["conv2_w"], (2, 1, 0))                # (3, 32, 64)  [tap, ci, co]
    c2b = params["conv2_b"].reshape(1, C2)
    # dense1 weight (128, 64*F), flat index c*F+f  ->  (F, 64, 128)  [f, c, j]
    w1p = jnp.transpose(params["dense1_w"].reshape(C3, C2, F), (2, 1, 0))
    bd1 = params["dense1_b"].reshape(1, C3)
    wo = params["out_w"].T                                           # (128, 1)
    bo = params["out_b"].reshape(1, 1)

    kernel = _make_kernel(B, F)

    def full(shape):
        nd = len(shape)
        return pl.BlockSpec(shape, lambda i, _nd=nd: (0,) * _nd)

    operands = (x_k, c1w, c1b, s1, t1, c2w, c2b, s2, t2, w1p, bd1, s3, t3, wo, bo)
    in_specs = [full(op.shape) for op in operands]

    flops = 2 * (R * C1 * 3 + R * C1 * C2 * 3 + B * C2 * F * C3 + B * C3)
    bytes_accessed = 4 * (sum(int(op.size) for op in operands) + B)

    return pl.pallas_call(
        kernel,
        out_shape=jax.ShapeDtypeStruct((B, 1), x.dtype),
        grid_spec=pltpu.PrefetchScalarGridSpec(
            num_scalar_prefetch=0,
            grid=(1,),
            in_specs=in_specs,
            out_specs=pl.BlockSpec((B, 1), lambda i: (0, 0)),
        ),
        compiler_params=pltpu.CompilerParams(
            dimension_semantics=("arbitrary",)),
        cost_estimate=pl.CostEstimate(flops=flops, transcendentals=0,
                                      bytes_accessed=bytes_accessed),
    )(*operands)


# ----------------------------------------------------------------------------- reference
def _conv1d_same_ref(x, w, b):
    # x: (B, Cin, F), w: (Cout, Cin, 3), b: (Cout,)
    F_ = x.shape[-1]
    xp = jnp.pad(x, ((0, 0), (0, 0), (1, 1)))
    out = sum(jnp.einsum("bcf,oc->bof", xp[:, :, k:k + F_], w[:, :, k])
              for k in range(3))
    return out + b[None, :, None]


def reference_forward(x, p):
    B = x.shape[0]

    def bn(h, pfx):
        s = p[pfx + "_g"] / jnp.sqrt(p[pfx + "_v"] + BN_EPS)
        t = p[pfx + "_b"] - p[pfx + "_m"] * s
        if h.ndim == 3:
            return h * s[None, :, None] + t[None, :, None]
        return h * s[None, :] + t[None, :]

    h = _conv1d_same_ref(x[:, None, :], p["conv1_w"], p["conv1_b"])
    h = bn(jax.nn.relu(h), "bn1")
    h = _conv1d_same_ref(h, p["conv2_w"], p["conv2_b"])
    h = bn(jax.nn.relu(h), "bn2")
    h = h.reshape(B, -1)                                  # PyTorch order: c*F + f
    h = jax.nn.relu(h @ p["dense1_w"].T + p["dense1_b"])
    h = bn(h, "bn3")
    return h @ p["out_w"].T + p["out_b"]


# ----------------------------------------------------------------------------- params
def init_params(key, n_features):
    ks = jax.random.split(key, 20)

    def rnd(k, shape, std):
        return jax.random.normal(k, shape, jnp.float32) * std

    return {
        "conv1_w": rnd(ks[0], (C1, 1, 3), 0.3), "conv1_b": rnd(ks[1], (C1,), 0.1),
        "conv2_w": rnd(ks[2], (C2, C1, 3), 0.3), "conv2_b": rnd(ks[3], (C2,), 0.1),
        "dense1_w": rnd(ks[4], (C3, C2 * n_features), 0.05),
        "dense1_b": rnd(ks[5], (C3,), 0.1),
        "out_w": rnd(ks[6], (1, C3), 0.2), "out_b": rnd(ks[7], (1,), 0.1),
        # BatchNorm eval-mode parameters (affine + running stats)
        "bn1_g": 1.0 + rnd(ks[8], (C1,), 0.1), "bn1_b": rnd(ks[9], (C1,), 0.1),
        "bn1_m": rnd(ks[10], (C1,), 0.1),
        "bn1_v": jax.random.uniform(ks[11], (C1,), jnp.float32, 0.5, 1.5),
        "bn2_g": 1.0 + rnd(ks[12], (C2,), 0.1), "bn2_b": rnd(ks[13], (C2,), 0.1),
        "bn2_m": rnd(ks[14], (C2,), 0.1),
        "bn2_v": jax.random.uniform(ks[15], (C2,), jnp.float32, 0.5, 1.5),
        "bn3_g": 1.0 + rnd(ks[16], (C3,), 0.1), "bn3_b": rnd(ks[17], (C3,), 0.1),
        "bn3_m": rnd(ks[18], (C3,), 0.1),
        "bn3_v": jax.random.uniform(ks[19], (C3,), jnp.float32, 0.5, 1.5),
    }


if __name__ == "__main__":
    key = jax.random.PRNGKey(0)
    kx, kp = jax.random.split(key)
    B, n_features = 2, 16
    x = jax.random.normal(kx, (B, n_features), jnp.float32)
    params = init_params(kp, n_features)

    out = cnn_model_forward(x, params)
    jax.block_until_ready(out)
    assert out.shape == (B, 1)

    ref = reference_forward(x, params)
    assert jnp.allclose(out, ref, rtol=2e-2, atol=2e-2), (out, ref)
    print("KERNEL_OK")
</pallas_src>

<mosaic_0001>
module attributes {stable_mosaic.version = 11 : i64} {
  func.func @kernel(%arg0: i32, %arg1: memref<32x1xf32, #tpu.memory_space<vmem>>, %arg2: memref<3x32xf32, #tpu.memory_space<vmem>>, %arg3: memref<1x32xf32, #tpu.memory_space<vmem>>, %arg4: memref<1x32xf32, #tpu.memory_space<vmem>>, %arg5: memref<1x32xf32, #tpu.memory_space<vmem>>, %arg6: memref<3x32x64xf32, #tpu.memory_space<vmem>>, %arg7: memref<1x64xf32, #tpu.memory_space<vmem>>, %arg8: memref<1x64xf32, #tpu.memory_space<vmem>>, %arg9: memref<1x64xf32, #tpu.memory_space<vmem>>, %arg10: memref<16x64x128xf32, #tpu.memory_space<vmem>>, %arg11: memref<1x128xf32, #tpu.memory_space<vmem>>, %arg12: memref<1x128xf32, #tpu.memory_space<vmem>>, %arg13: memref<1x128xf32, #tpu.memory_space<vmem>>, %arg14: memref<128x1xf32, #tpu.memory_space<vmem>>, %arg15: memref<1x1xf32, #tpu.memory_space<vmem>>, %arg16: memref<2x1xf32, #tpu.memory_space<vmem>>) attributes {dimension_semantics = [#tpu.dimension_semantics<arbitrary>], iteration_bounds = array<i64: 1>, scalar_prefetch = 0 : i64, scratch_operands = 0 : i64, tpu.core_type = #tpu.core_type<tc>, window_params = [{pipeline_mode = #tpu.pipeline_mode<synchronous>, transform_indices = @transform_0, window_bounds = array<i64: 32, 1>}, {pipeline_mode = #tpu.pipeline_mode<synchronous>, transform_indices = @transform_1, window_bounds = array<i64: 3, 32>}, {pipeline_mode = #tpu.pipeline_mode<synchronous>, transform_indices = @transform_2, window_bounds = array<i64: 1, 32>}, {pipeline_mode = #tpu.pipeline_mode<synchronous>, transform_indices = @transform_3, window_bounds = array<i64: 1, 32>}, {pipeline_mode = #tpu.pipeline_mode<synchronous>, transform_indices = @transform_4, window_bounds = array<i64: 1, 32>}, {pipeline_mode = #tpu.pipeline_mode<synchronous>, transform_indices = @transform_5, window_bounds = array<i64: 3, 32, 64>}, {pipeline_mode = #tpu.pipeline_mode<synchronous>, transform_indices = @transform_6, window_bounds = array<i64: 1, 64>}, {pipeline_mode = #tpu.pipeline_mode<synchronous>, transform_indices = @transform_7, window_bounds = array<i64: 1, 64>}, {pipeline_mode = #tpu.pipeline_mode<synchronous>, transform_indices = @transform_8, window_bounds = array<i64: 1, 64>}, {pipeline_mode = #tpu.pipeline_mode<synchronous>, transform_indices = @transform_9, window_bounds = array<i64: 16, 64, 128>}, {pipeline_mode = #tpu.pipeline_mode<synchronous>, transform_indices = @transform_10, window_bounds = array<i64: 1, 128>}, {pipeline_mode = #tpu.pipeline_mode<synchronous>, transform_indices = @transform_11, window_bounds = array<i64: 1, 128>}, {pipeline_mode = #tpu.pipeline_mode<synchronous>, transform_indices = @transform_12, window_bounds = array<i64: 1, 128>}, {pipeline_mode = #tpu.pipeline_mode<synchronous>, transform_indices = @transform_13, window_bounds = array<i64: 128, 1>}, {pipeline_mode = #tpu.pipeline_mode<synchronous>, transform_indices = @transform_14, window_bounds = array<i64: 1, 1>}, {pipeline_mode = #tpu.pipeline_mode<synchronous>, transform_indices = @transform_15, window_bounds = array<i64: 2, 1>}]} {
    %c0 = arith.constant 0 : index
    %c0_0 = arith.constant 0 : index
    %0 = vector.load %arg1[%c0, %c0_0] : memref<32x1xf32, #tpu.memory_space<vmem>>, vector<32x1xf32>
    %cst = arith.constant 0.000000e+00 : f32
    %1 = vector.broadcast %cst : f32 to vector<2x1xf32>
    %2 = vector.extract_strided_slice %0 {offsets = [0, 0], sizes = [30, 1], strides = [1, 1]} : vector<32x1xf32> to vector<30x1xf32>
    %3 = tpu.concatenate %1, %2 in 0 : vector<2x1xf32>, vector<30x1xf32> -> vector<32x1xf32>
    %c0_1 = arith.constant 0 : index
    %c0_2 = arith.constant 0 : index
    %4 = vector.load %arg2[%c0_1, %c0_2] : memref<3x32xf32, #tpu.memory_space<vmem>>, vector<1x32xf32>
    %5 = vector.broadcast %3 : vector<32x1xf32> to vector<32x32xf32>
    %6 = vector.broadcast %4 : vector<1x32xf32> to vector<32x32xf32>
    %7 = arith.mulf %5, %6 : vector<32x32xf32>
    %c1 = arith.constant 1 : index
    %c0_3 = arith.constant 0 : index
    %8 = vector.load %arg2[%c1, %c0_3] : memref<3x32xf32, #tpu.memory_space<vmem>>, vector<1x32xf32>
    %9 = vector.broadcast %0 : vector<32x1xf32> to vector<32x32xf32>
    %10 = vector.broadcast %8 : vector<1x32xf32> to vector<32x32xf32>
    %11 = arith.mulf %9, %10 : vector<32x32xf32>
    %12 = arith.addf %7, %11 : vector<32x32xf32>
    %13 = vector.extract_strided_slice %0 {offsets = [2, 0], sizes = [30, 1], strides = [1, 1]} : vector<32x1xf32> to vector<30x1xf32>
    %cst_4 = arith.constant 0.000000e+00 : f32
    %14 = vector.broadcast %cst_4 : f32 to vector<2x1xf32>
    %15 = tpu.concatenate %13, %14 in 0 : vector<30x1xf32>, vector<2x1xf32> -> vector<32x1xf32>
    %c2 = arith.constant 2 : index
    %c0_5 = arith.constant 0 : index
    %16 = vector.load %arg2[%c2, %c0_5] : memref<3x32xf32, #tpu.memory_space<vmem>>, vector<1x32xf32>
    %17 = vector.broadcast %15 : vector<32x1xf32> to vector<32x32xf32>
    %18 = vector.broadcast %16 : vector<1x32xf32> to vector<32x32xf32>
    %19 = arith.mulf %17, %18 : vector<32x32xf32>
    %20 = arith.addf %12, %19 : vector<32x32xf32>
    %c0_6 = arith.constant 0 : index
    %c0_7 = arith.constant 0 : index
    %21 = vector.load %arg3[%c0_6, %c0_7] : memref<1x32xf32, #tpu.memory_space<vmem>>, vector<1x32xf32>
    %22 = vector.broadcast %21 : vector<1x32xf32> to vector<32x32xf32>
    %23 = arith.addf %20, %22 : vector<32x32xf32>
    %cst_8 = arith.constant 0.000000e+00 : f32
    %24 = vector.broadcast %cst_8 : f32 to vector<32x32xf32>
    %25 = arith.maximumf %23, %24 : vector<32x32xf32>
    %c0_9 = arith.constant 0 : index
    %c0_10 = arith.constant 0 : index
    %26 = vector.load %arg4[%c0_9, %c0_10] : memref<1x32xf32, #tpu.memory_space<vmem>>, vector<1x32xf32>
    %27 = vector.broadcast %26 : vector<1x32xf32> to vector<32x32xf32>
    %28 = arith.mulf %25, %27 : vector<32x32xf32>
    %c0_11 = arith.constant 0 : index
    %c0_12 = arith.constant 0 : index
    %29 = vector.load %arg5[%c0_11, %c0_12] : memref<1x32xf32, #tpu.memory_space<vmem>>, vector<1x32xf32>
    %30 = vector.broadcast %29 : vector<1x32xf32> to vector<32x32xf32>
    %31 = arith.addf %28, %30 : vector<32x32xf32>
    %cst_13 = arith.constant 0.000000e+00 : f32
    %32 = vector.broadcast %cst_13 : f32 to vector<2x32xf32>
    %33 = vector.extract_strided_slice %31 {offsets = [0, 0], sizes = [30, 32], strides = [1, 1]} : vector<32x32xf32> to vector<30x32xf32>
    %34 = tpu.concatenate %32, %33 in 0 : vector<2x32xf32>, vector<30x32xf32> -> vector<32x32xf32>
    %c0_14 = arith.constant 0 : index
    %c0_15 = arith.constant 0 : index
    %c0_16 = arith.constant 0 : index
    %35 = vector.load %arg6[%c0_14, %c0_15, %c0_16] : memref<3x32x64xf32, #tpu.memory_space<vmem>>, vector<1x32x64xf32>
    %36 = vector.shape_cast %35 : vector<1x32x64xf32> to vector<32x64xf32>
    %cst_17 = arith.constant dense<0.000000e+00> : vector<32x64xf32>
    %37 = tpu.matmul %34, %36, %cst_17 {dimension_numbers = #tpu.dot_dimension_numbers<[1], [0], [0], [1], [0, 0, 1, 1], [], []>} : vector<32x32xf32>, vector<32x64xf32>, vector<32x64xf32> -> vector<32x64xf32>
    %c1_18 = arith.constant 1 : index
    %c0_19 = arith.constant 0 : index
    %c0_20 = arith.constant 0 : index
    %38 = vector.load %arg6[%c1_18, %c0_19, %c0_20] : memref<3x32x64xf32, #tpu.memory_space<vmem>>, vector<1x32x64xf32>
    %39 = vector.shape_cast %38 : vector<1x32x64xf32> to vector<32x64xf32>
    %cst_21 = arith.constant dense<0.000000e+00> : vector<32x64xf32>
    %40 = tpu.matmul %31, %39, %cst_21 {dimension_numbers = #tpu.dot_dimension_numbers<[1], [0], [0], [1], [0, 0, 1, 1], [], []>} : vector<32x32xf32>, vector<32x64xf32>, vector<32x64xf32> -> vector<32x64xf32>
    %41 = arith.addf %37, %40 : vector<32x64xf32>
    %42 = vector.extract_strided_slice %31 {offsets = [2, 0], sizes = [30, 32], strides = [1, 1]} : vector<32x32xf32> to vector<30x32xf32>
    %cst_22 = arith.constant 0.000000e+00 : f32
    %43 = vector.broadcast %cst_22 : f32 to vector<2x32xf32>
    %44 = tpu.concatenate %42, %43 in 0 : vector<30x32xf32>, vector<2x32xf32> -> vector<32x32xf32>
    %c2_23 = arith.constant 2 : index
    %c0_24 = arith.constant 0 : index
    %c0_25 = arith.constant 0 : index
    %45 = vector.load %arg6[%c2_23, %c0_24, %c0_25] : memref<3x32x64xf32, #tpu.memory_space<vmem>>, vector<1x32x64xf32>
    %46 = vector.shape_cast %45 : vector<1x32x64xf32> to vector<32x64xf32>
    %cst_26 = arith.constant dense<0.000000e+00> : vector<32x64xf32>
    %47 = tpu.matmul %44, %46, %cst_26 {dimension_numbers = #tpu.dot_dimension_numbers<[1], [0], [0], [1], [0, 0, 1, 1], [], []>} : vector<32x32xf32>, vector<32x64xf32>, vector<32x64xf32> -> vector<32x64xf32>
    %48 = arith.addf %41, %47 : vector<32x64xf32>
    %c0_27 = arith.constant 0 : index
    %c0_28 = arith.constant 0 : index
    %49 = vector.load %arg7[%c0_27, %c0_28] : memref<1x64xf32, #tpu.memory_space<vmem>>, vector<1x64xf32>
    %50 = vector.broadcast %49 : vector<1x64xf32> to vector<32x64xf32>
    %51 = arith.addf %48, %50 : vector<32x64xf32>
    %cst_29 = arith.constant 0.000000e+00 : f32
    %52 = vector.broadcast %cst_29 : f32 to vector<32x64xf32>
    %53 = arith.maximumf %51, %52 : vector<32x64xf32>
    %c0_30 = arith.constant 0 : index
    %c0_31 = arith.constant 0 : index
    %54 = vector.load %arg8[%c0_30, %c0_31] : memref<1x64xf32, #tpu.memory_space<vmem>>, vector<1x64xf32>
    %55 = vector.broadcast %54 : vector<1x64xf32> to vector<32x64xf32>
    %56 = arith.mulf %53, %55 : vector<32x64xf32>
    %c0_32 = arith.constant 0 : index
    %c0_33 = arith.constant 0 : index
    %57 = vector.load %arg9[%c0_32, %c0_33] : memref<1x64xf32, #tpu.memory_space<vmem>>, vector<1x64xf32>
    %58 = vector.broadcast %57 : vector<1x64xf32> to vector<32x64xf32>
    %59 = arith.addf %56, %58 : vector<32x64xf32>
    %cst_34 = arith.constant 0.000000e+00 : f32
    %60 = vector.broadcast %cst_34 : f32 to vector<2x128xf32>
    %c0_35 = arith.constant 0 : index
    %c0_36 = arith.constant 0 : index
    %61 = vector.load %arg11[%c0_35, %c0_36] : memref<1x128xf32, #tpu.memory_space<vmem>>, vector<1x128xf32>
    %62 = vector.broadcast %61 : vector<1x128xf32> to vector<2x128xf32>
    %63 = arith.addf %60, %62 : vector<2x128xf32>
    %64 = vector.extract_strided_slice %59 {offsets = [0, 0], sizes = [2, 64], strides = [1, 1]} : vector<32x64xf32> to vector<2x64xf32>
    %c0_37 = arith.constant 0 : index
    %c0_38 = arith.constant 0 : index
    %c0_39 = arith.constant 0 : index
    %65 = vector.load %arg10[%c0_37, %c0_38, %c0_39] : memref<16x64x128xf32, #tpu.memory_space<vmem>>, vector<1x64x128xf32>
    %66 = vector.shape_cast %65 : vector<1x64x128xf32> to vector<64x128xf32>
    %cst_40 = arith.constant dense<0.000000e+00> : vector<2x128xf32>
    %67 = tpu.matmul %64, %66, %cst_40 {dimension_numbers = #tpu.dot_dimension_numbers<[1], [0], [0], [1], [0, 0, 1, 1], [], []>} : vector<2x64xf32>, vector<64x128xf32>, vector<2x128xf32> -> vector<2x128xf32>
    %68 = arith.addf %63, %67 : vector<2x128xf32>
    %69 = vector.extract_strided_slice %59 {offsets = [2, 0], sizes = [2, 64], strides = [1, 1]} : vector<32x64xf32> to vector<2x64xf32>
    %c1_41 = arith.constant 1 : index
    %c0_42 = arith.constant 0 : index
    %c0_43 = arith.constant 0 : index
    %70 = vector.load %arg10[%c1_41, %c0_42, %c0_43] : memref<16x64x128xf32, #tpu.memory_space<vmem>>, vector<1x64x128xf32>
    %71 = vector.shape_cast %70 : vector<1x64x128xf32> to vector<64x128xf32>
    %cst_44 = arith.constant dense<0.000000e+00> : vector<2x128xf32>
    %72 = tpu.matmul %69, %71, %cst_44 {dimension_numbers = #tpu.dot_dimension_numbers<[1], [0], [0], [1], [0, 0, 1, 1], [], []>} : vector<2x64xf32>, vector<64x128xf32>, vector<2x128xf32> -> vector<2x128xf32>
    %73 = arith.addf %68, %72 : vector<2x128xf32>
    %74 = vector.extract_strided_slice %59 {offsets = [4, 0], sizes = [2, 64], strides = [1, 1]} : vector<32x64xf32> to vector<2x64xf32>
    %c2_45 = arith.constant 2 : index
    %c0_46 = arith.constant 0 : index
    %c0_47 = arith.constant 0 : index
    %75 = vector.load %arg10[%c2_45, %c0_46, %c0_47] : memref<16x64x128xf32, #tpu.memory_space<vmem>>, vector<1x64x128xf32>
    %76 = vector.shape_cast %75 : vector<1x64x128xf32> to vector<64x128xf32>
    %cst_48 = arith.constant dense<0.000000e+00> : vector<2x128xf32>
    %77 = tpu.matmul %74, %76, %cst_48 {dimension_numbers = #tpu.dot_dimension_numbers<[1], [0], [0], [1], [0, 0, 1, 1], [], []>} : vector<2x64xf32>, vector<64x128xf32>, vector<2x128xf32> -> vector<2x128xf32>
    %78 = arith.addf %73, %77 : vector<2x128xf32>
    %79 = vector.extract_strided_slice %59 {offsets = [6, 0], sizes = [2, 64], strides = [1, 1]} : vector<32x64xf32> to vector<2x64xf32>
    %c3 = arith.constant 3 : index
    %c0_49 = arith.constant 0 : index
    %c0_50 = arith.constant 0 : index
    %80 = vector.load %arg10[%c3, %c0_49, %c0_50] : memref<16x64x128xf32, #tpu.memory_space<vmem>>, vector<1x64x128xf32>
    %81 = vector.shape_cast %80 : vector<1x64x128xf32> to vector<64x128xf32>
    %cst_51 = arith.constant dense<0.000000e+00> : vector<2x128xf32>
    %82 = tpu.matmul %79, %81, %cst_51 {dimension_numbers = #tpu.dot_dimension_numbers<[1], [0], [0], [1], [0, 0, 1, 1], [], []>} : vector<2x64xf32>, vector<64x128xf32>, vector<2x128xf32> -> vector<2x128xf32>
    %83 = arith.addf %78, %82 : vector<2x128xf32>
    %84 = vector.extract_strided_slice %59 {offsets = [8, 0], sizes = [2, 64], strides = [1, 1]} : vector<32x64xf32> to vector<2x64xf32>
    %c4 = arith.constant 4 : index
    %c0_52 = arith.constant 0 : index
    %c0_53 = arith.constant 0 : index
    %85 = vector.load %arg10[%c4, %c0_52, %c0_53] : memref<16x64x128xf32, #tpu.memory_space<vmem>>, vector<1x64x128xf32>
    %86 = vector.shape_cast %85 : vector<1x64x128xf32> to vector<64x128xf32>
    %cst_54 = arith.constant dense<0.000000e+00> : vector<2x128xf32>
    %87 = tpu.matmul %84, %86, %cst_54 {dimension_numbers = #tpu.dot_dimension_numbers<[1], [0], [0], [1], [0, 0, 1, 1], [], []>} : vector<2x64xf32>, vector<64x128xf32>, vector<2x128xf32> -> vector<2x128xf32>
    %88 = arith.addf %83, %87 : vector<2x128xf32>
    %89 = vector.extract_strided_slice %59 {offsets = [10, 0], sizes = [2, 64], strides = [1, 1]} : vector<32x64xf32> to vector<2x64xf32>
    %c5 = arith.constant 5 : index
    %c0_55 = arith.constant 0 : index
    %c0_56 = arith.constant 0 : index
    %90 = vector.load %arg10[%c5, %c0_55, %c0_56] : memref<16x64x128xf32, #tpu.memory_space<vmem>>, vector<1x64x128xf32>
    %91 = vector.shape_cast %90 : vector<1x64x128xf32> to vector<64x128xf32>
    %cst_57 = arith.constant dense<0.000000e+00> : vector<2x128xf32>
    %92 = tpu.matmul %89, %91, %cst_57 {dimension_numbers = #tpu.dot_dimension_numbers<[1], [0], [0], [1], [0, 0, 1, 1], [], []>} : vector<2x64xf32>, vector<64x128xf32>, vector<2x128xf32> -> vector<2x128xf32>
    %93 = arith.addf %88, %92 : vector<2x128xf32>
    %94 = vector.extract_strided_slice %59 {offsets = [12, 0], sizes = [2, 64], strides = [1, 1]} : vector<32x64xf32> to vector<2x64xf32>
    %c6 = arith.constant 6 : index
    %c0_58 = arith.constant 0 : index
    %c0_59 = arith.constant 0 : index
    %95 = vector.load %arg10[%c6, %c0_58, %c0_59] : memref<16x64x128xf32, #tpu.memory_space<vmem>>, vector<1x64x128xf32>
    %96 = vector.shape_cast %95 : vector<1x64x128xf32> to vector<64x128xf32>
    %cst_60 = arith.constant dense<0.000000e+00> : vector<2x128xf32>
    %97 = tpu.matmul %94, %96, %cst_60 {dimension_numbers = #tpu.dot_dimension_numbers<[1], [0], [0], [1], [0, 0, 1, 1], [], []>} : vector<2x64xf32>, vector<64x128xf32>, vector<2x128xf32> -> vector<2x128xf32>
    %98 = arith.addf %93, %97 : vector<2x128xf32>
    %99 = vector.extract_strided_slice %59 {offsets = [14, 0], sizes = [2, 64], strides = [1, 1]} : vector<32x64xf32> to vector<2x64xf32>
    %c7 = arith.constant 7 : index
    %c0_61 = arith.constant 0 : index
    %c0_62 = arith.constant 0 : index
    %100 = vector.load %arg10[%c7, %c0_61, %c0_62] : memref<16x64x128xf32, #tpu.memory_space<vmem>>, vector<1x64x128xf32>
    %101 = vector.shape_cast %100 : vector<1x64x128xf32> to vector<64x128xf32>
    %cst_63 = arith.constant dense<0.000000e+00> : vector<2x128xf32>
    %102 = tpu.matmul %99, %101, %cst_63 {dimension_numbers = #tpu.dot_dimension_numbers<[1], [0], [0], [1], [0, 0, 1, 1], [], []>} : vector<2x64xf32>, vector<64x128xf32>, vector<2x128xf32> -> vector<2x128xf32>
    %103 = arith.addf %98, %102 : vector<2x128xf32>
    %104 = vector.extract_strided_slice %59 {offsets = [16, 0], sizes = [2, 64], strides = [1, 1]} : vector<32x64xf32> to vector<2x64xf32>
    %c8 = arith.constant 8 : index
    %c0_64 = arith.constant 0 : index
    %c0_65 = arith.constant 0 : index
    %105 = vector.load %arg10[%c8, %c0_64, %c0_65] : memref<16x64x128xf32, #tpu.memory_space<vmem>>, vector<1x64x128xf32>
    %106 = vector.shape_cast %105 : vector<1x64x128xf32> to vector<64x128xf32>
    %cst_66 = arith.constant dense<0.000000e+00> : vector<2x128xf32>
    %107 = tpu.matmul %104, %106, %cst_66 {dimension_numbers = #tpu.dot_dimension_numbers<[1], [0], [0], [1], [0, 0, 1, 1], [], []>} : vector<2x64xf32>, vector<64x128xf32>, vector<2x128xf32> -> vector<2x128xf32>
    %108 = arith.addf %103, %107 : vector<2x128xf32>
    %109 = vector.extract_strided_slice %59 {offsets = [18, 0], sizes = [2, 64], strides = [1, 1]} : vector<32x64xf32> to vector<2x64xf32>
    %c9 = arith.constant 9 : index
    %c0_67 = arith.constant 0 : index
    %c0_68 = arith.constant 0 : index
    %110 = vector.load %arg10[%c9, %c0_67, %c0_68] : memref<16x64x128xf32, #tpu.memory_space<vmem>>, vector<1x64x128xf32>
    %111 = vector.shape_cast %110 : vector<1x64x128xf32> to vector<64x128xf32>
    %cst_69 = arith.constant dense<0.000000e+00> : vector<2x128xf32>
    %112 = tpu.matmul %109, %111, %cst_69 {dimension_numbers = #tpu.dot_dimension_numbers<[1], [0], [0], [1], [0, 0, 1, 1], [], []>} : vector<2x64xf32>, vector<64x128xf32>, vector<2x128xf32> -> vector<2x128xf32>
    %113 = arith.addf %108, %112 : vector<2x128xf32>
    %114 = vector.extract_strided_slice %59 {offsets = [20, 0], sizes = [2, 64], strides = [1, 1]} : vector<32x64xf32> to vector<2x64xf32>
    %c10 = arith.constant 10 : index
    %c0_70 = arith.constant 0 : index
    %c0_71 = arith.constant 0 : index
    %115 = vector.load %arg10[%c10, %c0_70, %c0_71] : memref<16x64x128xf32, #tpu.memory_space<vmem>>, vector<1x64x128xf32>
    %116 = vector.shape_cast %115 : vector<1x64x128xf32> to vector<64x128xf32>
    %cst_72 = arith.constant dense<0.000000e+00> : vector<2x128xf32>
    %117 = tpu.matmul %114, %116, %cst_72 {dimension_numbers = #tpu.dot_dimension_numbers<[1], [0], [0], [1], [0, 0, 1, 1], [], []>} : vector<2x64xf32>, vector<64x128xf32>, vector<2x128xf32> -> vector<2x128xf32>
    %118 = arith.addf %113, %117 : vector<2x128xf32>
    %119 = vector.extract_strided_slice %59 {offsets = [22, 0], sizes = [2, 64], strides = [1, 1]} : vector<32x64xf32> to vector<2x64xf32>
    %c11 = arith.constant 11 : index
    %c0_73 = arith.constant 0 : index
    %c0_74 = arith.constant 0 : index
    %120 = vector.load %arg10[%c11, %c0_73, %c0_74] : memref<16x64x128xf32, #tpu.memory_space<vmem>>, vector<1x64x128xf32>
    %121 = vector.shape_cast %120 : vector<1x64x128xf32> to vector<64x128xf32>
    %cst_75 = arith.constant dense<0.000000e+00> : vector<2x128xf32>
    %122 = tpu.matmul %119, %121, %cst_75 {dimension_numbers = #tpu.dot_dimension_numbers<[1], [0], [0], [1], [0, 0, 1, 1], [], []>} : vector<2x64xf32>, vector<64x128xf32>, vector<2x128xf32> -> vector<2x128xf32>
    %123 = arith.addf %118, %122 : vector<2x128xf32>
    %124 = vector.extract_strided_slice %59 {offsets = [24, 0], sizes = [2, 64], strides = [1, 1]} : vector<32x64xf32> to vector<2x64xf32>
    %c12 = arith.constant 12 : index
    %c0_76 = arith.constant 0 : index
    %c0_77 = arith.constant 0 : index
    %125 = vector.load %arg10[%c12, %c0_76, %c0_77] : memref<16x64x128xf32, #tpu.memory_space<vmem>>, vector<1x64x128xf32>
    %126 = vector.shape_cast %125 : vector<1x64x128xf32> to vector<64x128xf32>
    %cst_78 = arith.constant dense<0.000000e+00> : vector<2x128xf32>
    %127 = tpu.matmul %124, %126, %cst_78 {dimension_numbers = #tpu.dot_dimension_numbers<[1], [0], [0], [1], [0, 0, 1, 1], [], []>} : vector<2x64xf32>, vector<64x128xf32>, vector<2x128xf32> -> vector<2x128xf32>
    %128 = arith.addf %123, %127 : vector<2x128xf32>
    %129 = vector.extract_strided_slice %59 {offsets = [26, 0], sizes = [2, 64], strides = [1, 1]} : vector<32x64xf32> to vector<2x64xf32>
    %c13 = arith.constant 13 : index
    %c0_79 = arith.constant 0 : index
    %c0_80 = arith.constant 0 : index
    %130 = vector.load %arg10[%c13, %c0_79, %c0_80] : memref<16x64x128xf32, #tpu.memory_space<vmem>>, vector<1x64x128xf32>
    %131 = vector.shape_cast %130 : vector<1x64x128xf32> to vector<64x128xf32>
    %cst_81 = arith.constant dense<0.000000e+00> : vector<2x128xf32>
    %132 = tpu.matmul %129, %131, %cst_81 {dimension_numbers = #tpu.dot_dimension_numbers<[1], [0], [0], [1], [0, 0, 1, 1], [], []>} : vector<2x64xf32>, vector<64x128xf32>, vector<2x128xf32> -> vector<2x128xf32>
    %133 = arith.addf %128, %132 : vector<2x128xf32>
    %134 = vector.extract_strided_slice %59 {offsets = [28, 0], sizes = [2, 64], strides = [1, 1]} : vector<32x64xf32> to vector<2x64xf32>
    %c14 = arith.constant 14 : index
    %c0_82 = arith.constant 0 : index
    %c0_83 = arith.constant 0 : index
    %135 = vector.load %arg10[%c14, %c0_82, %c0_83] : memref<16x64x128xf32, #tpu.memory_space<vmem>>, vector<1x64x128xf32>
    %136 = vector.shape_cast %135 : vector<1x64x128xf32> to vector<64x128xf32>
    %cst_84 = arith.constant dense<0.000000e+00> : vector<2x128xf32>
    %137 = tpu.matmul %134, %136, %cst_84 {dimension_numbers = #tpu.dot_dimension_numbers<[1], [0], [0], [1], [0, 0, 1, 1], [], []>} : vector<2x64xf32>, vector<64x128xf32>, vector<2x128xf32> -> vector<2x128xf32>
    %138 = arith.addf %133, %137 : vector<2x128xf32>
    %139 = vector.extract_strided_slice %59 {offsets = [30, 0], sizes = [2, 64], strides = [1, 1]} : vector<32x64xf32> to vector<2x64xf32>
    %c15 = arith.constant 15 : index
    %c0_85 = arith.constant 0 : index
    %c0_86 = arith.constant 0 : index
    %140 = vector.load %arg10[%c15, %c0_85, %c0_86] : memref<16x64x128xf32, #tpu.memory_space<vmem>>, vector<1x64x128xf32>
    %141 = vector.shape_cast %140 : vector<1x64x128xf32> to vector<64x128xf32>
    %cst_87 = arith.constant dense<0.000000e+00> : vector<2x128xf32>
    %142 = tpu.matmul %139, %141, %cst_87 {dimension_numbers = #tpu.dot_dimension_numbers<[1], [0], [0], [1], [0, 0, 1, 1], [], []>} : vector<2x64xf32>, vector<64x128xf32>, vector<2x128xf32> -> vector<2x128xf32>
    %143 = arith.addf %138, %142 : vector<2x128xf32>
    %cst_88 = arith.constant 0.000000e+00 : f32
    %144 = vector.broadcast %cst_88 : f32 to vector<2x128xf32>
    %145 = arith.maximumf %143, %144 : vector<2x128xf32>
    %c0_89 = arith.constant 0 : index
    %c0_90 = arith.constant 0 : index
    %146 = vector.load %arg12[%c0_89, %c0_90] : memref<1x128xf32, #tpu.memory_space<vmem>>, vector<1x128xf32>
    %147 = vector.broadcast %146 : vector<1x128xf32> to vector<2x128xf32>
    %148 = arith.mulf %145, %147 : vector<2x128xf32>
    %c0_91 = arith.constant 0 : index
    %c0_92 = arith.constant 0 : index
    %149 = vector.load %arg13[%c0_91, %c0_92] : memref<1x128xf32, #tpu.memory_space<vmem>>, vector<1x128xf32>
    %150 = vector.broadcast %149 : vector<1x128xf32> to vector<2x128xf32>
    %151 = arith.addf %148, %150 : vector<2x128xf32>
    %c0_93 = arith.constant 0 : index
    %c0_94 = arith.constant 0 : index
    %152 = vector.load %arg14[%c0_93, %c0_94] : memref<128x1xf32, #tpu.memory_space<vmem>>, vector<128x1xf32>
    %cst_95 = arith.constant dense<0.000000e+00> : vector<2x1xf32>
    %153 = tpu.matmul %151, %152, %cst_95 {dimension_numbers = #tpu.dot_dimension_numbers<[1], [0], [0], [1], [0, 0, 1, 1], [], []>} : vector<2x128xf32>, vector<128x1xf32>, vector<2x1xf32> -> vector<2x1xf32>
    %c0_96 = arith.constant 0 : index
    %c0_97 = arith.constant 0 : index
    %154 = vector.load %arg15[%c0_96, %c0_97] : memref<1x1xf32, #tpu.memory_space<vmem>>, vector<1x1xf32>
    %155 = vector.broadcast %154 : vector<1x1xf32> to vector<2x1xf32>
    %156 = arith.addf %153, %155 : vector<2x1xf32>
    %c0_98 = arith.constant 0 : index
    %c0_99 = arith.constant 0 : index
    %157 = vector.load %arg16[%c0_98, %c0_99] : memref<2x1xf32, #tpu.memory_space<vmem>>, vector<2x1xf32>
    tpu.vector_store %arg16[%c0_98, %c0_99], %156 {strides = array<i32>} : memref<2x1xf32, #tpu.memory_space<vmem>>, vector<2x1xf32>,
    return
  }
  func.func @transform_0(%arg0: i32) -> (i32, i32) {
    %c0_i32 = arith.constant 0 : i32
    %c0_i32_0 = arith.constant 0 : i32
    %c0_i32_1 = arith.constant 0 : i32
    return %c0_i32, %c0_i32_0 : i32, i32
  }
  func.func @transform_1(%arg0: i32) -> (i32, i32) {
    %c0_i32 = arith.constant 0 : i32
    %c0_i32_0 = arith.constant 0 : i32
    %c0_i32_1 = arith.constant 0 : i32
    return %c0_i32, %c0_i32_0 : i32, i32
  }
  func.func @transform_2(%arg0: i32) -> (i32, i32) {
    %c0_i32 = arith.constant 0 : i32
    %c0_i32_0 = arith.constant 0 : i32
    %c0_i32_1 = arith.constant 0 : i32
    return %c0_i32, %c0_i32_0 : i32, i32
  }
  func.func @transform_3(%arg0: i32) -> (i32, i32) {
    %c0_i32 = arith.constant 0 : i32
    %c0_i32_0 = arith.constant 0 : i32
    %c0_i32_1 = arith.constant 0 : i32
    return %c0_i32, %c0_i32_0 : i32, i32
  }
  func.func @transform_4(%arg0: i32) -> (i32, i32) {
    %c0_i32 = arith.constant 0 : i32
    %c0_i32_0 = arith.constant 0 : i32
    %c0_i32_1 = arith.constant 0 : i32
    return %c0_i32, %c0_i32_0 : i32, i32
  }
  func.func @transform_5(%arg0: i32) -> (i32, i32, i32) {
    %c0_i32 = arith.constant 0 : i32
    %c0_i32_0 = arith.constant 0 : i32
    %c0_i32_1 = arith.constant 0 : i32
    %c0_i32_2 = arith.constant 0 : i32
    return %c0_i32, %c0_i32_0, %c0_i32_1 : i32, i32, i32
  }
  func.func @transform_6(%arg0: i32) -> (i32, i32) {
    %c0_i32 = arith.constant 0 : i32
    %c0_i32_0 = arith.constant 0 : i32
    %c0_i32_1 = arith.constant 0 : i32
    return %c0_i32, %c0_i32_0 : i32, i32
  }
  func.func @transform_7(%arg0: i32) -> (i32, i32) {
    %c0_i32 = arith.constant 0 : i32
    %c0_i32_0 = arith.constant 0 : i32
    %c0_i32_1 = arith.constant 0 : i32
    return %c0_i32, %c0_i32_0 : i32, i32
  }
  func.func @transform_8(%arg0: i32) -> (i32, i32) {
    %c0_i32 = arith.constant 0 : i32
    %c0_i32_0 = arith.constant 0 : i32
    %c0_i32_1 = arith.constant 0 : i32
    return %c0_i32, %c0_i32_0 : i32, i32
  }
  func.func @transform_9(%arg0: i32) -> (i32, i32, i32) {
    %c0_i32 = arith.constant 0 : i32
    %c0_i32_0 = arith.constant 0 : i32
    %c0_i32_1 = arith.constant 0 : i32
    %c0_i32_2 = arith.constant 0 : i32
    return %c0_i32, %c0_i32_0, %c0_i32_1 : i32, i32, i32
  }
  func.func @transform_10(%arg0: i32) -> (i32, i32) {
    %c0_i32 = arith.constant 0 : i32
    %c0_i32_0 = arith.constant 0 : i32
    %c0_i32_1 = arith.constant 0 : i32
    return %c0_i32, %c0_i32_0 : i32, i32
  }
  func.func @transform_11(%arg0: i32) -> (i32, i32) {
    %c0_i32 = arith.constant 0 : i32
    %c0_i32_0 = arith.constant 0 : i32
    %c0_i32_1 = arith.constant 0 : i32
    return %c0_i32, %c0_i32_0 : i32, i32
  }
  func.func @transform_12(%arg0: i32) -> (i32, i32) {
    %c0_i32 = arith.constant 0 : i32
    %c0_i32_0 = arith.constant 0 : i32
    %c0_i32_1 = arith.constant 0 : i32
    return %c0_i32, %c0_i32_0 : i32, i32
  }
  func.func @transform_13(%arg0: i32) -> (i32, i32) {
    %c0_i32 = arith.constant 0 : i32
    %c0_i32_0 = arith.constant 0 : i32
    %c0_i32_1 = arith.constant 0 : i32
    return %c0_i32, %c0_i32_0 : i32, i32
  }
  func.func @transform_14(%arg0: i32) -> (i32, i32) {
    %c0_i32 = arith.constant 0 : i32
    %c0_i32_0 = arith.constant 0 : i32
    %c0_i32_1 = arith.constant 0 : i32
    return %c0_i32, %c0_i32_0 : i32, i32
  }
  func.func @transform_15(%arg0: i32) -> (i32, i32) {
    %c0_i32 = arith.constant 0 : i32
    %c0_i32_0 = arith.constant 0 : i32
    %c0_i32_1 = arith.constant 0 : i32
    return %c0_i32, %c0_i32_0 : i32, i32
  }
}

</mosaic_0001>

<llo_original>
// kernel: tpu_custom_call.1
$region0: #{tpu_custom_call.1}
  #allocation0 [shape = 'u32[]', space=smem, size = 0x4, offset = 0x4, fixed_abs, tag = 'smem constant byte address 0x4 - core index']
  #allocation1 [shape = 'u32[144,128]{1,0:T(1,128)}', space=vmem, size = 0x12000, scoped, tag = 'internal scratch']
  #allocation2 [shape = 'f32[1,1]{1,0:T(1,128)S(1)}', space=vmem, size = 0x200, scoped, tag = 'scoped memory for tpu_custom_call.1']
  %s0 = inlined_call_operand.vmem [shape: f32[32,1], index: 0, kind: input, shape index: {}]
  %s1 = inlined_call_operand.vmem [shape: f32[3,32], index: 1, kind: input, shape index: {}]
  %s2 = inlined_call_operand.vmem [shape: f32[1,32], index: 2, kind: input, shape index: {}]
  %s3 = inlined_call_operand.vmem [shape: f32[1,32], index: 3, kind: input, shape index: {}]
  %s4 = inlined_call_operand.vmem [shape: f32[1,32], index: 4, kind: input, shape index: {}]
  %s5 = inlined_call_operand.vmem [shape: f32[3,32,64], index: 5, kind: input, shape index: {}]
  %s6 = inlined_call_operand.vmem [shape: f32[1,64], index: 6, kind: input, shape index: {}]
  %s7 = inlined_call_operand.vmem [shape: f32[1,64], index: 7, kind: input, shape index: {}]
  %s8 = inlined_call_operand.vmem [shape: f32[1,64], index: 8, kind: input, shape index: {}]
  %s9 = inlined_call_operand.hbm [shape: f32[16,64,128], index: 9, kind: input, shape index: {}]
  %s10 = inlined_call_operand.vmem [shape: f32[1,128], index: 10, kind: input, shape index: {}]
  %s11 = inlined_call_operand.vmem [shape: f32[1,128], index: 11, kind: input, shape index: {}]
  %s12 = inlined_call_operand.vmem [shape: f32[1,128], index: 12, kind: input, shape index: {}]
  %s13 = inlined_call_operand.vmem [shape: f32[128,1], index: 13, kind: input, shape index: {}]
  %s14 = inlined_call_operand.<no memory space> [shape: f32[1,1], index: 14, kind: input, shape index: {}]
  %s15 = inlined_call_operand.vmem [shape: f32[2,1], index: 15, kind: output, shape index: {}]
  %s16 = sld [smem:[#allocation0]]
  $region74: #{tpu_custom_call.1} parent=0
    _
  %s18 = ssub.s32 1, %s16
  %s19 = scalar_select 0, %s18, %s16
  %v20 = vstv %s14
  %21 = vst [vmem:[#allocation2] sm:$0x1] %v20
  $region1: #{tpu_custom_call.1} parent=0
    #allocation3 [shape = 'u8[524288]{0}', space=vmem, size = 0x80000, scoped, tag = 'input window, operand 9, single buffered']
    #allocation4 [shape = 's32[1]{0}', space=sflag, size = 0x4, scoped, tag = 'scoped memory for tpu_custom_call.1']
    %22 = vsyncpa [#allocation4], 0
    // Predicated region
    $region2: #{tpu_custom_call.1} parent=1 // pred_check
      _
    $region3: #{tpu_custom_call.1} parent=1 // pred_check_branch
      %24 = sbr.rel (0) target = $region5
    $region4: #{tpu_custom_call.1} parent=1 // pred_region
      _
    $region5: #{tpu_custom_call.1} parent=1 // pred_fallthru
      _
    // Predicated region
    $region6: #{tpu_custom_call.1} parent=1 // pred_check
      _
    $region7: #{tpu_custom_call.1} parent=1 // pred_check_branch
      %26 = sbr.rel (0) target = $region9
    $region8: #{tpu_custom_call.1} parent=1 // pred_region
      _
    $region9: #{tpu_custom_call.1} parent=1 // pred_fallthru
      _
    // Predicated region
    $region10: #{tpu_custom_call.1} parent=1 // pred_check
      _
    $region11: #{tpu_custom_call.1} parent=1 // pred_check_branch
      %28 = sbr.rel (0) target = $region13
    $region12: #{tpu_custom_call.1} parent=1 // pred_region
      _
    $region13: #{tpu_custom_call.1} parent=1 // pred_fallthru
      _
    // Predicated region
    $region14: #{tpu_custom_call.1} parent=1 // pred_check
      _
    $region15: #{tpu_custom_call.1} parent=1 // pred_check_branch
      %30 = sbr.rel (0) target = $region17
    $region16: #{tpu_custom_call.1} parent=1 // pred_region
      _
    $region17: #{tpu_custom_call.1} parent=1 // pred_fallthru
      _
    // Predicated region
    $region18: #{tpu_custom_call.1} parent=1 // pred_check
      _
    $region19: #{tpu_custom_call.1} parent=1 // pred_check_branch
      %32 = sbr.rel (0) target = $region21
    $region20: #{tpu_custom_call.1} parent=1 // pred_region
      _
    $region21: #{tpu_custom_call.1} parent=1 // pred_fallthru
      _
    // Predicated region
    $region22: #{tpu_custom_call.1} parent=1 // pred_check
      _
    $region23: #{tpu_custom_call.1} parent=1 // pred_check_branch
      %34 = sbr.rel (0) target = $region25
    $region24: #{tpu_custom_call.1} parent=1 // pred_region
      _
    $region25: #{tpu_custom_call.1} parent=1 // pred_fallthru
      _
    // Predicated region
    $region26: #{tpu_custom_call.1} parent=1 // pred_check
      _
    $region27: #{tpu_custom_call.1} parent=1 // pred_check_branch
      %36 = sbr.rel (0) target = $region29
    $region28: #{tpu_custom_call.1} parent=1 // pred_region
      _
    $region29: #{tpu_custom_call.1} parent=1 // pred_fallthru
      _
    // Predicated region
    $region30: #{tpu_custom_call.1} parent=1 // pred_check
      _
    $region31: #{tpu_custom_call.1} parent=1 // pred_check_branch
      %38 = sbr.rel (0) target = $region33
    $region32: #{tpu_custom_call.1} parent=1 // pred_region
      _
    $region33: #{tpu_custom_call.1} parent=1 // pred_fallthru
      _
    // Predicated region
    $region34: #{tpu_custom_call.1} parent=1 // pred_check
      _
    $region35: #{tpu_custom_call.1} parent=1 // pred_check_branch
      %40 = sbr.rel (0) target = $region37
    $region36: #{tpu_custom_call.1} parent=1 // pred_region
      _
    $region37: #{tpu_custom_call.1} parent=1 // pred_fallthru
      _
    // Predicated region
    $region38: #{tpu_custom_call.1} parent=1 // pred_check
      _
    $region39: #{tpu_custom_call.1} parent=1 // pred_check_branch
      %42 = sbr.rel (0) target = $region41
    $region40: #{tpu_custom_call.1} parent=1 // pred_region
      %s44 = ssub.s32 16384, 16384
      %45 = vsyncadd [#allocation4], %s44
      %s46 = sshll.u32 [#allocation3], 4
      %s47 = int_to_ptr.vmem [resolvable:$true] %s46
      %52 = dma.hbm_to_vmem [thread:$0]  %s9, 16384, %s47, [#allocation4], 128, 128, 8
    $region41: #{tpu_custom_call.1} parent=1 // pred_fallthru
      _
    // Predicated region
    $region42: #{tpu_custom_call.1} parent=1 // pred_check
      _
    $region43: #{tpu_custom_call.1} parent=1 // pred_check_branch
      %54 = sbr.rel (0) target = $region45
    $region44: #{tpu_custom_call.1} parent=1 // pred_region
      _
    $region45: #{tpu_custom_call.1} parent=1 // pred_fallthru
      _
    // Predicated region
    $region46: #{tpu_custom_call.1} parent=1 // pred_check
      _
    $region47: #{tpu_custom_call.1} parent=1 // pred_check_branch
      %56 = sbr.rel (0) target = $region49
    $region48: #{tpu_custom_call.1} parent=1 // pred_region
      _
    $region49: #{tpu_custom_call.1} parent=1 // pred_fallthru
      _
    // Predicated region
    $region50: #{tpu_custom_call.1} parent=1 // pred_check
      _
    $region51: #{tpu_custom_call.1} parent=1 // pred_check_branch
      %58 = sbr.rel (0) target = $region53
    $region52: #{tpu_custom_call.1} parent=1 // pred_region
      _
    $region53: #{tpu_custom_call.1} parent=1 // pred_fallthru
      _
    // Predicated region
    $region54: #{tpu_custom_call.1} parent=1 // pred_check
      _
    $region55: #{tpu_custom_call.1} parent=1 // pred_check_branch
      %60 = sbr.rel (0) target = $region57
    $region56: #{tpu_custom_call.1} parent=1 // pred_region
      _
    $region57: #{tpu_custom_call.1} parent=1 // pred_fallthru
      _
    // Predicated region
    $region58: #{tpu_custom_call.1} parent=1 // pred_check
      _
    $region59: #{tpu_custom_call.1} parent=1 // pred_check_branch
      %62 = sbr.rel (0) target = $region61
    $region60: #{tpu_custom_call.1} parent=1 // pred_region
      _
    $region61: #{tpu_custom_call.1} parent=1 // pred_fallthru
      _
    // Predicated region
    $region62: #{tpu_custom_call.1} parent=1 // pred_check
      _
    $region63: #{tpu_custom_call.1} parent=1 // pred_check_branch
      %64 = sbr.rel (0) target = $region65
    $region64: #{tpu_custom_call.1} parent=1 // pred_region
      %65 = dma.done [#allocation4], 16384
    $region65: #{tpu_custom_call.1} parent=1 // pred_fallthru
      _
    %v66 = vld [vmem:[%s0] sm:$0xff]
    %v67 = vld [vmem:[%s0 + $0x8] sm:$0xff]
    %v68 = vld [vmem:[%s0 + $0x10] sm:$0xff]
    %v69 = vld [vmem:[%s0 + $0x18] sm:$0xff]
    %vm74 = vcmask 1041408
    %v75 = vrot.slane %v66, 6
    %v76 = vrot.slane %v67, 6
    %v77 = vsel %vm74, %v75, %v76
    %v78 = vrot.slane %v68, 6
    %v79 = vsel %vm74, %v76, %v78
    %v80 = vrot.slane %v69, 6
    %v81 = vsel %vm74, %v78, %v80
    %v83 = vsel %vm74, 0.0, %v75
    %v84 = vld [vmem:[%s1] sm:$0x1]
    %86 = vset.pattern.permute.xlu0 0
    %87 = vperm.xlu0 %86, %v83
    %v88 = vpop.permute.xlu0 %87
    %90 = vset.pattern.permute.xlu0 0
    %91 = vperm.xlu0 %90, %v77
    %v92 = vpop.permute.xlu0 %91
    %94 = vset.pattern.permute.xlu0 0
    %95 = vperm.xlu0 %94, %v79
    %v96 = vpop.permute.xlu0 %95
    %98 = vset.pattern.permute.xlu0 0
    %99 = vperm.xlu0 %98, %v81
    %v100 = vpop.permute.xlu0 %99
    %v102 = vlaneseq
    %v103 = vshrl.u32 %v102, 7
    %v104 = vsub.s32 0, %v103
    %v105 = vrot.slane %v84, %v104
    %v106 = vmul.f32 %v88, %v105
    %v107 = vmul.f32 %v92, %v105
    %v108 = vmul.f32 %v96, %v105
    %v109 = vmul.f32 %v100, %v105
    %v110 = vld [vmem:[%s1 + $0x1] sm:$0x1]
    %111 = vset.pattern.permute.xlu0 0
    %112 = vperm.xlu0 %111, %v66
    %v113 = vpop.permute.xlu0 %112
    %115 = vset.pattern.permute.xlu0 0
    %116 = vperm.xlu0 %115, %v67
    %v117 = vpop.permute.xlu0 %116
    %119 = vset.pattern.permute.xlu0 0
    %120 = vperm.xlu0 %119, %v68
    %v121 = vpop.permute.xlu0 %120
    %123 = vset.pattern.permute.xlu0 0
    %124 = vperm.xlu0 %123, %v69
    %v125 = vpop.permute.xlu0 %124
    %v127 = vlaneseq
    %v128 = vshrl.u32 %v127, 7
    %v129 = vsub.s32 0, %v128
    %v130 = vrot.slane %v110, %v129
    %v131 = vmul.f32 %v113, %v130
    %v132 = vmul.f32 %v117, %v130
    %v133 = vmul.f32 %v121, %v130
    %v134 = vmul.f32 %v125, %v130
    %v135 = vadd.f32 %v106, %v131
    %v136 = vadd.f32 %v107, %v132
    %v137 = vadd.f32 %v108, %v133
    %v138 = vadd.f32 %v109, %v134
    %vm139 = vcmask 1045504
    %v140 = vrot.slane %v66, 2
    %v141 = vrot.slane %v67, 2
    %v142 = vsel %vm139, %v140, %v141
    %v143 = vrot.slane %v68, 2
    %v144 = vsel %vm139, %v141, %v143
    %v145 = vrot.slane %v69, 2
    %v146 = vsel %vm139, %v143, %v145
    %v148 = vsel %vm139, %v145, 0.0
    %v149 = vld [vmem:[%s1 + $0x2] sm:$0x1]
    %150 = vset.pattern.permute.xlu0 0
    %151 = vperm.xlu0 %150, %v142
    %v152 = vpop.permute.xlu0 %151
    %154 = vset.pattern.permute.xlu0 0
    %155 = vperm.xlu0 %154, %v144
    %v156 = vpop.permute.xlu0 %155
    %158 = vset.pattern.permute.xlu0 0
    %159 = vperm.xlu0 %158, %v146
    %v160 = vpop.permute.xlu0 %159
    %163 = vset.pattern.permute.xlu0 0
    %164 = vperm.xlu0 %163, %v148
    %v165 = vpop.permute.xlu0 %164
    %v167 = vlaneseq
    %v168 = vshrl.u32 %v167, 7
    %v169 = vsub.s32 0, %v168
    %v170 = vrot.slane %v149, %v169
    %v171 = vmul.f32 %v152, %v170
    %v172 = vmul.f32 %v156, %v170
    %v173 = vmul.f32 %v160, %v170
    %v174 = vmul.f32 %v165, %v170
    %v175 = vadd.f32 %v135, %v171
    %v176 = vadd.f32 %v136, %v172
    %v177 = vadd.f32 %v137, %v173
    %v178 = vadd.f32 %v138, %v174
    %v179 = vld [vmem:[%s2] sm:$0x1]
    %v181 = vlaneseq
    %v182 = vshrl.u32 %v181, 7
    %v183 = vsub.s32 0, %v182
    %v184 = vrot.slane %v179, %v183
    %v186 = vadd.f32 %v175, %v184
    %v187 = vadd.f32 %v176, %v184
    %v188 = vadd.f32 %v177, %v184
    %v189 = vadd.f32 %v178, %v184
    %v190 = vmax.f32 %v186, 0.0
    %v191 = vmax.f32 %v187, 0.0
    %v192 = vmax.f32 %v188, 0.0
    %v193 = vmax.f32 %v189, 0.0
    %v194 = vld [vmem:[%s3] sm:$0x1]
    %v196 = vlaneseq
    %v197 = vshrl.u32 %v196, 7
    %v198 = vsub.s32 0, %v197
    %v199 = vrot.slane %v194, %v198
    %v201 = vmul.f32 %v190, %v199
    %v202 = vmul.f32 %v191, %v199
    %v203 = vmul.f32 %v192, %v199
    %v204 = vmul.f32 %v193, %v199
    %v205 = vld [vmem:[%s4] sm:$0x1]
    %v207 = vlaneseq
    %v208 = vshrl.u32 %v207, 7
    %v209 = vsub.s32 0, %v208
    %v210 = vrot.slane %v205, %v209
    %v212 = vadd.f32 %v201, %v210
    %v213 = vadd.f32 %v202, %v210
    %v214 = vadd.f32 %v203, %v210
    %v215 = vadd.f32 %v204, %v210
    %v220 = vrot.slane %v212, 6
    %v221 = vrot.slane %v213, 6
    %v222 = vsel %vm74, %v220, %v221
    %v223 = vrot.slane %v214, 6
    %v224 = vsel %vm74, %v221, %v223
    %v225 = vrot.slane %v215, 6
    %v226 = vsel %vm74, %v223, %v225
    %v228 = vsel %vm74, 0.0, %v220
    %v229 = vld [vmem:[%s5] sm:$0xff]
    %v230 = vld [vmem:[%s5 + $0x8] sm:$0xff]
    %v231 = vld [vmem:[%s5 + $0x10] sm:$0xff]
    %v232 = vld [vmem:[%s5 + $0x18] sm:$0xff]
    %s233 = scalar_lea.vmem %s5, 32
    %v234 = vld [vmem:[%s233] sm:$0xff]
    %v235 = vld [vmem:[%s233 + $0x8] sm:$0xff]
    %v236 = vld [vmem:[%s233 + $0x10] sm:$0xff]
    %v237 = vld [vmem:[%s233 + $0x18] sm:$0xff]
    %vm238 = vcmask 261120
    %v239 = vsel %vm238, %v212, 0
    %v241 = vsel %vm238, %v213, 0
    %v243 = vsel %vm238, %v214, 0
    %v245 = vsel %vm238, %v215, 0
    %247 = vmatprep.subr.mxu0 0.0
    %248 = vmatpush1.msra.mxu0 %v234
    %249 = vmatprep.subr.mxu0 0.0
    %250 = vmatpush1.msra.mxu0 %v235
    %251 = vmatprep.subr.mxu0 0.0
    %252 = vmatpush1.msra.mxu0 %v236
    %253 = vmatprep.subr.mxu0 0.0
    %254 = vmatpush1.msra.mxu0 %v237
    %255 = vmatprep.subr.mxu0 0.0
    %256 = vmatpush1.msra.mxu0 0.0
    %257 = vmatprep.subr.mxu0 0.0
    %258 = vmatpush1.msra.mxu0 0.0
    %259 = vmatprep.subr.mxu0 0.0
    %260 = vmatpush1.msra.mxu0 0.0
    %261 = vmatprep.subr.mxu0 0.0
    %262 = vmatpush1.msra.mxu0 0.0
    %263 = vmatprep.subr.mxu0 0.0
    %264 = vmatpush1.msra.mxu0 0.0
    %265 = vmatprep.subr.mxu0 0.0
    %266 = vmatpush1.msra.mxu0 0.0
    %267 = vmatprep.subr.mxu0 0.0
    %268 = vmatpush1.msra.mxu0 0.0
    %269 = vmatprep.subr.mxu0 0.0
    %270 = vmatpush1.msra.mxu0 0.0
    %271 = vmatprep.subr.mxu0 0.0
    %272 = vmatpush1.msra.mxu0 0.0
    %273 = vmatprep.subr.mxu0 0.0
    %274 = vmatpush1.msra.mxu0 0.0
    %275 = vmatprep.subr.mxu0 0.0
    %276 = vmatpush1.msra.mxu0 0.0
    %277 = vmatprep.subr.mxu0 0.0
    %278 = vmatpush1.msra.mxu0 0.0
    %279 = vmatprep.subr.mxu0 0.0
    %280 = vmatpush1.msra.mxu0 0.0
    %281 = vmatprep.subr.mxu0 0.0
    %282 = vmatpush1.msra.mxu0 0.0
    %283 = vmatprep.subr.mxu0 0.0
    %284 = vmatpush1.msra.mxu0 0.0
    %285 = vmatprep.subr.mxu0 0.0
    %286 = vmatpush1.msra.mxu0 0.0
    %287 = vmatprep.subr.mxu0 0.0
    %288 = vmatpush1.msra.mxu0 0.0
    %289 = vmatprep.subr.mxu0 0.0
    %290 = vmatpush1.msra.mxu0 0.0
    %291 = vmatprep.subr.mxu0 0.0
    %292 = vmatpush1.msra.mxu0 0.0
    %293 = vmatprep.subr.mxu0 0.0
    %294 = vmatpush1.msra.mxu0 0.0
    %295 = vmatprep.subr.mxu0 0.0
    %296 = vmatpush1.msra.mxu0 0.0
    %297 = vmatprep.subr.mxu0 0.0
    %298 = vmatpush1.msra.mxu0 0.0
    %299 = vmatprep.subr.mxu0 0.0
    %300 = vmatpush1.msra.mxu0 0.0
    %301 = vmatprep.subr.mxu0 0.0
    %302 = vmatpush1.msra.mxu0 0.0
    %303 = vmatprep.subr.mxu0 0.0
    %304 = vmatpush1.msra.mxu0 0.0
    %305 = vmatprep.subr.mxu0 0.0
    %306 = vmatpush1.msra.mxu0 0.0
    %307 = vmatprep.subr.mxu0 0.0
    %308 = vmatpush1.msra.mxu0 0.0
    %309 = vmatprep.subr.mxu0 0.0
    %310 = vmatpush1.msra.mxu0 0.0
    %311 = vmatprep.mubr.f32.mxu0 0.0
    %312 = vmatmul.mubr.f32.gmra.mrb[0].mxu0 %v239
    %v313 = vpop.f32.mrb[0].mxu0
    %v314 = vadd.f32 0.0, %v313
    %v315 = vpop.f32.mrb[0].mxu0
    %316 = vmatprep.mubr.f32.mxu0 0.0
    %317 = vmatmul.mubr.f32.gmra.mrb[0].mxu0 %v241
    %v318 = vpop.f32.mrb[0].mxu0
    %v319 = vadd.f32 0.0, %v318
    %v320 = vpop.f32.mrb[0].mxu0
    %321 = vmatprep.mubr.f32.mxu0 0.0
    %322 = vmatmul.mubr.f32.gmra.mrb[0].mxu0 %v243
    %v323 = vpop.f32.mrb[0].mxu0
    %v324 = vadd.f32 0.0, %v323
    %v325 = vpop.f32.mrb[0].mxu0
    %326 = vmatprep.mubr.f32.mxu0 0.0
    %327 = vmatmul.mubr.f32.gmra.mrb[0].mxu0 %v245
    %v328 = vpop.f32.mrb[0].mxu0
    %v329 = vadd.f32 0.0, %v328
    %v330 = vpop.f32.mrb[0].mxu0
    %331 = vdwg.mxu0
    %v333 = vsel %vm238, %v228, 0
    %v335 = vsel %vm238, %v222, 0
    %v337 = vsel %vm238, %v224, 0
    %v339 = vsel %vm238, %v226, 0
    %341 = vmatprep.subr.mxu0 0.0
    %342 = vmatpush1.msra.mxu0 %v229
    %343 = vmatprep.subr.mxu0 0.0
    %344 = vmatpush1.msra.mxu0 %v230
    %345 = vmatprep.subr.mxu0 0.0
    %346 = vmatpush1.msra.mxu0 %v231
    %347 = vmatprep.subr.mxu0 0.0
    %348 = vmatpush1.msra.mxu0 %v232
    %349 = vmatprep.subr.mxu0 0.0
    %350 = vmatpush1.msra.mxu0 0.0
    %351 = vmatprep.subr.mxu0 0.0
    %352 = vmatpush1.msra.mxu0 0.0
    %353 = vmatprep.subr.mxu0 0.0
    %354 = vmatpush1.msra.mxu0 0.0
    %355 = vmatprep.subr.mxu0 0.0
    %356 = vmatpush1.msra.mxu0 0.0
    %357 = vmatprep.subr.mxu0 0.0
    %358 = vmatpush1.msra.mxu0 0.0
    %359 = vmatprep.subr.mxu0 0.0
    %360 = vmatpush1.msra.mxu0 0.0
    %361 = vmatprep.subr.mxu0 0.0
    %362 = vmatpush1.msra.mxu0 0.0
    %363 = vmatprep.subr.mxu0 0.0
    %364 = vmatpush1.msra.mxu0 0.0
    %365 = vmatprep.subr.mxu0 0.0
    %366 = vmatpush1.msra.mxu0 0.0
    %367 = vmatprep.subr.mxu0 0.0
    %368 = vmatpush1.msra.mxu0 0.0
    %369 = vmatprep.subr.mxu0 0.0
    %370 = vmatpush1.msra.mxu0 0.0
    %371 = vmatprep.subr.mxu0 0.0
    %372 = vmatpush1.msra.mxu0 0.0
    %373 = vmatprep.subr.mxu0 0.0
    %374 = vmatpush1.msra.mxu0 0.0
    %375 = vmatprep.subr.mxu0 0.0
    %376 = vmatpush1.msra.mxu0 0.0
    %377 = vmatprep.subr.mxu0 0.0
    %378 = vmatpush1.msra.mxu0 0.0
    %379 = vmatprep.subr.mxu0 0.0
    %380 = vmatpush1.msra.mxu0 0.0
    %381 = vmatprep.subr.mxu0 0.0
    %382 = vmatpush1.msra.mxu0 0.0
    %383 = vmatprep.subr.mxu0 0.0
    %384 = vmatpush1.msra.mxu0 0.0
    %385 = vmatprep.subr.mxu0 0.0
    %386 = vmatpush1.msra.mxu0 0.0
    %387 = vmatprep.subr.mxu0 0.0
    %388 = vmatpush1.msra.mxu0 0.0
    %389 = vmatprep.subr.mxu0 0.0
    %390 = vmatpush1.msra.mxu0 0.0
    %391 = vmatprep.subr.mxu0 0.0
    %392 = vmatpush1.msra.mxu0 0.0
    %393 = vmatprep.subr.mxu0 0.0
    %394 = vmatpush1.msra.mxu0 0.0
    %395 = vmatprep.subr.mxu0 0.0
    %396 = vmatpush1.msra.mxu0 0.0
    %397 = vmatprep.subr.mxu0 0.0
    %398 = vmatpush1.msra.mxu0 0.0
    %399 = vmatprep.subr.mxu0 0.0
    %400 = vmatpush1.msra.mxu0 0.0
    %401 = vmatprep.subr.mxu0 0.0
    %402 = vmatpush1.msra.mxu0 0.0
    %403 = vmatprep.subr.mxu0 0.0
    %404 = vmatpush1.msra.mxu0 0.0
    %405 = vmatprep.mubr.f32.mxu0 0.0
    %406 = vmatmul.mubr.f32.gmra.mrb[0].mxu0 %v333
    %v407 = vpop.f32.mrb[0].mxu0
    %v408 = vadd.f32 %v314, %v407
    %v409 = vpop.f32.mrb[0].mxu0
    %410 = vmatprep.mubr.f32.mxu0 0.0
    %411 = vmatmul.mubr.f32.gmra.mrb[0].mxu0 %v335
    %v412 = vpop.f32.mrb[0].mxu0
    %v413 = vadd.f32 %v319, %v412
    %v414 = vpop.f32.mrb[0].mxu0
    %415 = vmatprep.mubr.f32.mxu0 0.0
    %416 = vmatmul.mubr.f32.gmra.mrb[0].mxu0 %v337
    %v417 = vpop.f32.mrb[0].mxu0
    %v418 = vadd.f32 %v324, %v417
    %v419 = vpop.f32.mrb[0].mxu0
    %420 = vmatprep.mubr.f32.mxu0 0.0
    %421 = vmatmul.mubr.f32.gmra.mrb[0].mxu0 %v339
    %v422 = vpop.f32.mrb[0].mxu0
    %v423 = vadd.f32 %v329, %v422
    %v424 = vpop.f32.mrb[0].mxu0
    %425 = vdwg.mxu0
    %v426 = vrot.slane %v212, 2
    %v427 = vrot.slane %v213, 2
    %v428 = vsel %vm139, %v426, %v427
    %v429 = vrot.slane %v214, 2
    %v430 = vsel %vm139, %v427, %v429
    %v431 = vrot.slane %v215, 2
    %v432 = vsel %vm139, %v429, %v431
    %v434 = vsel %vm139, %v431, 0.0
    %s435 = scalar_lea.vmem %s5, 64
    %v436 = vld [vmem:[%s435] sm:$0xff]
    %v437 = vld [vmem:[%s435 + $0x8] sm:$0xff]
    %v438 = vld [vmem:[%s435 + $0x10] sm:$0xff]
    %v439 = vld [vmem:[%s435 + $0x18] sm:$0xff]
    %v440 = vsel %vm238, %v428, 0
    %v442 = vsel %vm238, %v430, 0
    %v444 = vsel %vm238, %v432, 0
    %v447 = vsel %vm238, %v434, 0
    %449 = vmatprep.subr.mxu0 0.0
    %450 = vmatpush1.msra.mxu0 %v436
    %451 = vmatprep.subr.mxu0 0.0
    %452 = vmatpush1.msra.mxu0 %v437
    %453 = vmatprep.subr.mxu0 0.0
    %454 = vmatpush1.msra.mxu0 %v438
    %455 = vmatprep.subr.mxu0 0.0
    %456 = vmatpush1.msra.mxu0 %v439
    %457 = vmatprep.subr.mxu0 0.0
    %458 = vmatpush1.msra.mxu0 0.0
    %459 = vmatprep.subr.mxu0 0.0
    %460 = vmatpush1.msra.mxu0 0.0
    %461 = vmatprep.subr.mxu0 0.0
    %462 = vmatpush1.msra.mxu0 0.0
    %463 = vmatprep.subr.mxu0 0.0
    %464 = vmatpush1.msra.mxu0 0.0
    %465 = vmatprep.subr.mxu0 0.0
    %466 = vmatpush1.msra.mxu0 0.0
    %467 = vmatprep.subr.mxu0 0.0
    %468 = vmatpush1.msra.mxu0 0.0
    %469 = vmatprep.subr.mxu0 0.0
    %470 = vmatpush1.msra.mxu0 0.0
    %471 = vmatprep.subr.mxu0 0.0
    %472 = vmatpush1.msra.mxu0 0.0
    %473 = vmatprep.subr.mxu0 0.0
    %474 = vmatpush1.msra.mxu0 0.0
    %475 = vmatprep.subr.mxu0 0.0
    %476 = vmatpush1.msra.mxu0 0.0
    %477 = vmatprep.subr.mxu0 0.0
    %478 = vmatpush1.msra.mxu0 0.0
    %479 = vmatprep.subr.mxu0 0.0
    %480 = vmatpush1.msra.mxu0 0.0
    %481 = vmatprep.subr.mxu0 0.0
    %482 = vmatpush1.msra.mxu0 0.0
    %483 = vmatprep.subr.mxu0 0.0
    %484 = vmatpush1.msra.mxu0 0.0
    %485 = vmatprep.subr.mxu0 0.0
    %486 = vmatpush1.msra.mxu0 0.0
    %487 = vmatprep.subr.mxu0 0.0
    %488 = vmatpush1.msra.mxu0 0.0
    %489 = vmatprep.subr.mxu0 0.0
    %490 = vmatpush1.msra.mxu0 0.0
    %491 = vmatprep.subr.mxu0 0.0
    %492 = vmatpush1.msra.mxu0 0.0
    %493 = vmatprep.subr.mxu0 0.0
    %494 = vmatpush1.msra.mxu0 0.0
    %495 = vmatprep.subr.mxu0 0.0
    %496 = vmatpush1.msra.mxu0 0.0
    %497 = vmatprep.subr.mxu0 0.0
    %498 = vmatpush1.msra.mxu0 0.0
    %499 = vmatprep.subr.mxu0 0.0
    %500 = vmatpush1.msra.mxu0 0.0
    %501 = vmatprep.subr.mxu0 0.0
    %502 = vmatpush1.msra.mxu0 0.0
    %503 = vmatprep.subr.mxu0 0.0
    %504 = vmatpush1.msra.mxu0 0.0
    %505 = vmatprep.subr.mxu0 0.0
    %506 = vmatpush1.msra.mxu0 0.0
    %507 = vmatprep.subr.mxu0 0.0
    %508 = vmatpush1.msra.mxu0 0.0
    %509 = vmatprep.subr.mxu0 0.0
    %510 = vmatpush1.msra.mxu0 0.0
    %511 = vmatprep.subr.mxu0 0.0
    %512 = vmatpush1.msra.mxu0 0.0
    %513 = vmatprep.mubr.f32.mxu0 0.0
    %514 = vmatmul.mubr.f32.gmra.mrb[0].mxu0 %v440
    %v515 = vpop.f32.mrb[0].mxu0
    %v516 = vadd.f32 0.0, %v515
    %v517 = vpop.f32.mrb[0].mxu0
    %518 = vmatprep.mubr.f32.mxu0 0.0
    %519 = vmatmul.mubr.f32.gmra.mrb[0].mxu0 %v442
    %v520 = vpop.f32.mrb[0].mxu0
    %v521 = vadd.f32 0.0, %v520
    %v522 = vpop.f32.mrb[0].mxu0
    %523 = vmatprep.mubr.f32.mxu0 0.0
    %524 = vmatmul.mubr.f32.gmra.mrb[0].mxu0 %v444
    %v525 = vpop.f32.mrb[0].mxu0
    %v526 = vadd.f32 0.0, %v525
    %v527 = vpop.f32.mrb[0].mxu0
    %528 = vmatprep.mubr.f32.mxu0 0.0
    %529 = vmatmul.mubr.f32.gmra.mrb[0].mxu0 %v447
    %v530 = vpop.f32.mrb[0].mxu0
    %v531 = vadd.f32 0.0, %v530
    %v532 = vpop.f32.mrb[0].mxu0
    %533 = vdwg.mxu0
    %v534 = vadd.f32 %v408, %v516
    %v535 = vadd.f32 %v413, %v521
    %v536 = vadd.f32 %v418, %v526
    %v537 = vadd.f32 %v423, %v531
    %v538 = vld [vmem:[%s6] sm:$0x1]
    %v540 = vlaneseq
    %v541 = vshrl.u32 %v540, 7
    %v542 = vsub.s32 0, %v541
    %v543 = vrot.slane %v538, %v542
    %v545 = vadd.f32 %v534, %v543
    %v546 = vadd.f32 %v535, %v543
    %v547 = vadd.f32 %v536, %v543
    %v548 = vadd.f32 %v537, %v543
    %v549 = vmax.f32 %v545, 0.0
    %v550 = vmax.f32 %v546, 0.0
    %v551 = vmax.f32 %v547, 0.0
    %v552 = vmax.f32 %v548, 0.0
    %v553 = vld [vmem:[%s7] sm:$0x1]
    %v555 = vlaneseq
    %v556 = vshrl.u32 %v555, 7
    %v557 = vsub.s32 0, %v556
    %v558 = vrot.slane %v553, %v557
    %v560 = vmul.f32 %v549, %v558
    %v561 = vmul.f32 %v550, %v558
    %v562 = vmul.f32 %v551, %v558
    %v563 = vmul.f32 %v552, %v558
    %v564 = vld [vmem:[%s8] sm:$0x1]
    %v566 = vlaneseq
    %v567 = vshrl.u32 %v566, 7
    %v568 = vsub.s32 0, %v567
    %v569 = vrot.slane %v564, %v568
    %v571 = vadd.f32 %v560, %v569
    %v572 = vadd.f32 %v561, %v569
    %v573 = vadd.f32 %v562, %v569
    %v574 = vadd.f32 %v563, %v569
    %v575 = vld [vmem:[%s10] sm:$0x1]
    %v577 = vlaneseq
    %v578 = vshrl.u32 %v577, 7
    %v579 = vsub.s32 0, %v578
    %v580 = vrot.slane %v575, %v579
    %v582 = vadd.f32 %v580, 0.0
    %v583 = vld [vmem:[#allocation3] sm:$0xff]
    %v584 = vld [vmem:[#allocation3 + $0x8] sm:$0xff]
    %v585 = vld [vmem:[#allocation3 + $0x10] sm:$0xff]
    %v586 = vld [vmem:[#allocation3 + $0x18] sm:$0xff]
    %v587 = vld [vmem:[#allocation3 + $0x20] sm:$0xff]
    %v588 = vld [vmem:[#allocation3 + $0x28] sm:$0xff]
    %v589 = vld [vmem:[#allocation3 + $0x30] sm:$0xff]
    %v590 = vld [vmem:[#allocation3 + $0x38] sm:$0xff]
    %vm591 = vcmask 523264
    %v593 = vsel %vm591, %v571, 0
    %595 = vmatprep.subr.mxu0 0.0
    %596 = vmatpush1.msra.mxu0 %v583
    %597 = vmatprep.subr.mxu0 0.0
    %598 = vmatpush1.msra.mxu0 %v584
    %599 = vmatprep.subr.mxu0 0.0
    %600 = vmatpush1.msra.mxu0 %v585
    %601 = vmatprep.subr.mxu0 0.0
    %602 = vmatpush1.msra.mxu0 %v586
    %603 = vmatprep.subr.mxu0 0.0
    %604 = vmatpush1.msra.mxu0 %v587
    %605 = vmatprep.subr.mxu0 0.0
    %606 = vmatpush1.msra.mxu0 %v588
    %607 = vmatprep.subr.mxu0 0.0
    %608 = vmatpush1.msra.mxu0 %v589
    %609 = vmatprep.subr.mxu0 0.0
    %610 = vmatpush1.msra.mxu0 %v590
    %611 = vmatprep.subr.mxu0 0.0
    %612 = vmatpush1.msra.mxu0 0.0
    %613 = vmatprep.subr.mxu0 0.0
    %614 = vmatpush1.msra.mxu0 0.0
    %615 = vmatprep.subr.mxu0 0.0
    %616 = vmatpush1.msra.mxu0 0.0
    %617 = vmatprep.subr.mxu0 0.0
    %618 = vmatpush1.msra.mxu0 0.0
    %619 = vmatprep.subr.mxu0 0.0
    %620 = vmatpush1.msra.mxu0 0.0
    %621 = vmatprep.subr.mxu0 0.0
    %622 = vmatpush1.msra.mxu0 0.0
    %623 = vmatprep.subr.mxu0 0.0
    %624 = vmatpush1.msra.mxu0 0.0
    %625 = vmatprep.subr.mxu0 0.0
    %626 = vmatpush1.msra.mxu0 0.0
    %627 = vmatprep.subr.mxu0 0.0
    %628 = vmatpush1.msra.mxu0 0.0
    %629 = vmatprep.subr.mxu0 0.0
    %630 = vmatpush1.msra.mxu0 0.0
    %631 = vmatprep.subr.mxu0 0.0
    %632 = vmatpush1.msra.mxu0 0.0
    %633 = vmatprep.subr.mxu0 0.0
    %634 = vmatpush1.msra.mxu0 0.0
    %635 = vmatprep.subr.mxu0 0.0
    %636 = vmatpush1.msra.mxu0 0.0
    %637 = vmatprep.subr.mxu0 0.0
    %638 = vmatpush1.msra.mxu0 0.0
    %639 = vmatprep.subr.mxu0 0.0
    %640 = vmatpush1.msra.mxu0 0.0
    %641 = vmatprep.subr.mxu0 0.0
    %642 = vmatpush1.msra.mxu0 0.0
    %643 = vmatprep.subr.mxu0 0.0
    %644 = vmatpush1.msra.mxu0 0.0
    %645 = vmatprep.subr.mxu0 0.0
    %646 = vmatpush1.msra.mxu0 0.0
    %647 = vmatprep.subr.mxu0 0.0
    %648 = vmatpush1.msra.mxu0 0.0
    %649 = vmatprep.subr.mxu0 0.0
    %650 = vmatpush1.msra.mxu0 0.0
    %651 = vmatprep.subr.mxu0 0.0
    %652 = vmatpush1.msra.mxu0 0.0
    %653 = vmatprep.subr.mxu0 0.0
    %654 = vmatpush1.msra.mxu0 0.0
    %655 = vmatprep.subr.mxu0 0.0
    %656 = vmatpush1.msra.mxu0 0.0
    %657 = vmatprep.subr.mxu0 0.0
    %658 = vmatpush1.msra.mxu0 0.0
    %659 = vmatprep.mubr.f32.mxu0 0.0
    %660 = vmatmul.mubr.f32.gmra.mrb[0].mxu0 %v593
    %v661 = vpop.f32.mrb[0].mxu0
    %v662 = vadd.f32 0.0, %v661
    %v663 = vpop.f32.mrb[0].mxu0
    %664 = vdwg.mxu0
    %v665 = vadd.f32 %v582, %v662
    %s666 = scalar_lea.vmem [#allocation3], 64
    %v667 = vld [vmem:[%s666] sm:$0xff]
    %v668 = vld [vmem:[%s666 + $0x8] sm:$0xff]
    %v669 = vld [vmem:[%s666 + $0x10] sm:$0xff]
    %v670 = vld [vmem:[%s666 + $0x18] sm:$0xff]
    %v671 = vld [vmem:[%s666 + $0x20] sm:$0xff]
    %v672 = vld [vmem:[%s666 + $0x28] sm:$0xff]
    %v673 = vld [vmem:[%s666 + $0x30] sm:$0xff]
    %v674 = vld [vmem:[%s666 + $0x38] sm:$0xff]
    %v675 = vrot.slane %v571, 2
    %v676 = vsel %vm591, %v675, 0
    %678 = vmatprep.subr.mxu0 0.0
    %679 = vmatpush1.msra.mxu0 %v667
    %680 = vmatprep.subr.mxu0 0.0
    %681 = vmatpush1.msra.mxu0 %v668
    %682 = vmatprep.subr.mxu0 0.0
    %683 = vmatpush1.msra.mxu0 %v669
    %684 = vmatprep.subr.mxu0 0.0
    %685 = vmatpush1.msra.mxu0 %v670
    %686 = vmatprep.subr.mxu0 0.0
    %687 = vmatpush1.msra.mxu0 %v671
    %688 = vmatprep.subr.mxu0 0.0
    %689 = vmatpush1.msra.mxu0 %v672
    %690 = vmatprep.subr.mxu0 0.0
    %691 = vmatpush1.msra.mxu0 %v673
    %692 = vmatprep.subr.mxu0 0.0
    %693 = vmatpush1.msra.mxu0 %v674
    %694 = vmatprep.subr.mxu0 0.0
    %695 = vmatpush1.msra.mxu0 0.0
    %696 = vmatprep.subr.mxu0 0.0
    %697 = vmatpush1.msra.mxu0 0.0
    %698 = vmatprep.subr.mxu0 0.0
    %699 = vmatpush1.msra.mxu0 0.0
    %700 = vmatprep.subr.mxu0 0.0
    %701 = vmatpush1.msra.mxu0 0.0
    %702 = vmatprep.subr.mxu0 0.0
    %703 = vmatpush1.msra.mxu0 0.0
    %704 = vmatprep.subr.mxu0 0.0
    %705 = vmatpush1.msra.mxu0 0.0
    %706 = vmatprep.subr.mxu0 0.0
    %707 = vmatpush1.msra.mxu0 0.0
    %708 = vmatprep.subr.mxu0 0.0
    %709 = vmatpush1.msra.mxu0 0.0
    %710 = vmatprep.subr.mxu0 0.0
    %711 = vmatpush1.msra.mxu0 0.0
    %712 = vmatprep.subr.mxu0 0.0
    %713 = vmatpush1.msra.mxu0 0.0
    %714 = vmatprep.subr.mxu0 0.0
    %715 = vmatpush1.msra.mxu0 0.0
    %716 = vmatprep.subr.mxu0 0.0
    %717 = vmatpush1.msra.mxu0 0.0
    %718 = vmatprep.subr.mxu0 0.0
    %719 = vmatpush1.msra.mxu0 0.0
    %720 = vmatprep.subr.mxu0 0.0
    %721 = vmatpush1.msra.mxu0 0.0
    %722 = vmatprep.subr.mxu0 0.0
    %723 = vmatpush1.msra.mxu0 0.0
    %724 = vmatprep.subr.mxu0 0.0
    %725 = vmatpush1.msra.mxu0 0.0
    %726 = vmatprep.subr.mxu0 0.0
    %727 = vmatpush1.msra.mxu0 0.0
    %728 = vmatprep.subr.mxu0 0.0
    %729 = vmatpush1.msra.mxu0 0.0
    %730 = vmatprep.subr.mxu0 0.0
    %731 = vmatpush1.msra.mxu0 0.0
    %732 = vmatprep.subr.mxu0 0.0
    %733 = vmatpush1.msra.mxu0 0.0
    %734 = vmatprep.subr.mxu0 0.0
    %735 = vmatpush1.msra.mxu0 0.0
    %736 = vmatprep.subr.mxu0 0.0
    %737 = vmatpush1.msra.mxu0 0.0
    %738 = vmatprep.subr.mxu0 0.0
    %739 = vmatpush1.msra.mxu0 0.0
    %740 = vmatprep.subr.mxu0 0.0
    %741 = vmatpush1.msra.mxu0 0.0
    %742 = vmatprep.mubr.f32.mxu0 0.0
    %743 = vmatmul.mubr.f32.gmra.mrb[0].mxu0 %v676
    %v744 = vpop.f32.mrb[0].mxu0
    %v745 = vadd.f32 0.0, %v744
    %v746 = vpop.f32.mrb[0].mxu0
    %747 = vdwg.mxu0
    %v748 = vadd.f32 %v665, %v745
    %s749 = scalar_lea.vmem [#allocation3], 128
    %v750 = vld [vmem:[%s749] sm:$0xff]
    %v751 = vld [vmem:[%s749 + $0x8] sm:$0xff]
    %v752 = vld [vmem:[%s749 + $0x10] sm:$0xff]
    %v753 = vld [vmem:[%s749 + $0x18] sm:$0xff]
    %v754 = vld [vmem:[%s749 + $0x20] sm:$0xff]
    %v755 = vld [vmem:[%s749 + $0x28] sm:$0xff]
    %v756 = vld [vmem:[%s749 + $0x30] sm:$0xff]
    %v757 = vld [vmem:[%s749 + $0x38] sm:$0xff]
    %v758 = vrot.slane %v571, 4
    %v759 = vsel %vm591, %v758, 0
    %761 = vmatprep.subr.mxu0 0.0
    %762 = vmatpush1.msra.mxu0 %v750
    %763 = vmatprep.subr.mxu0 0.0
    %764 = vmatpush1.msra.mxu0 %v751
    %765 = vmatprep.subr.mxu0 0.0
    %766 = vmatpush1.msra.mxu0 %v752
    %767 = vmatprep.subr.mxu0 0.0
    %768 = vmatpush1.msra.mxu0 %v753
    %769 = vmatprep.subr.mxu0 0.0
    %770 = vmatpush1.msra.mxu0 %v754
    %771 = vmatprep.subr.mxu0 0.0
    %772 = vmatpush1.msra.mxu0 %v755
    %773 = vmatprep.subr.mxu0 0.0
    %774 = vmatpush1.msra.mxu0 %v756
    %775 = vmatprep.subr.mxu0 0.0
    %776 = vmatpush1.msra.mxu0 %v757
    %777 = vmatprep.subr.mxu0 0.0
    %778 = vmatpush1.msra.mxu0 0.0
    %779 = vmatprep.subr.mxu0 0.0
    %780 = vmatpush1.msra.mxu0 0.0
    %781 = vmatprep.subr.mxu0 0.0
    %782 = vmatpush1.msra.mxu0 0.0
    %783 = vmatprep.subr.mxu0 0.0
    %784 = vmatpush1.msra.mxu0 0.0
    %785 = vmatprep.subr.mxu0 0.0
    %786 = vmatpush1.msra.mxu0 0.0
    %787 = vmatprep.subr.mxu0 0.0
    %788 = vmatpush1.msra.mxu0 0.0
    %789 = vmatprep.subr.mxu0 0.0
    %790 = vmatpush1.msra.mxu0 0.0
    %791 = vmatprep.subr.mxu0 0.0
    %792 = vmatpush1.msra.mxu0 0.0
    %793 = vmatprep.subr.mxu0 0.0
    %794 = vmatpush1.msra.mxu0 0.0
    %795 = vmatprep.subr.mxu0 0.0
    %796 = vmatpush1.msra.mxu0 0.0
    %797 = vmatprep.subr.mxu0 0.0
    %798 = vmatpush1.msra.mxu0 0.0
    %799 = vmatprep.subr.mxu0 0.0
    %800 = vmatpush1.msra.mxu0 0.0
    %801 = vmatprep.subr.mxu0 0.0
    %802 = vmatpush1.msra.mxu0 0.0
    %803 = vmatprep.subr.mxu0 0.0
    %804 = vmatpush1.msra.mxu0 0.0
    %805 = vmatprep.subr.mxu0 0.0
    %806 = vmatpush1.msra.mxu0 0.0
    %807 = vmatprep.subr.mxu0 0.0
    %808 = vmatpush1.msra.mxu0 0.0
    %809 = vmatprep.subr.mxu0 0.0
    %810 = vmatpush1.msra.mxu0 0.0
    %811 = vmatprep.subr.mxu0 0.0
    %812 = vmatpush1.msra.mxu0 0.0
    %813 = vmatprep.subr.mxu0 0.0
    %814 = vmatpush1.msra.mxu0 0.0
    %815 = vmatprep.subr.mxu0 0.0
    %816 = vmatpush1.msra.mxu0 0.0
    %817 = vmatprep.subr.mxu0 0.0
    %818 = vmatpush1.msra.mxu0 0.0
    %819 = vmatprep.subr.mxu0 0.0
    %820 = vmatpush1.msra.mxu0 0.0
    %821 = vmatprep.subr.mxu0 0.0
    %822 = vmatpush1.msra.mxu0 0.0
    %823 = vmatprep.subr.mxu0 0.0
    %824 = vmatpush1.msra.mxu0 0.0
    %825 = vmatprep.mubr.f32.mxu0 0.0
    %826 = vmatmul.mubr.f32.gmra.mrb[0].mxu0 %v759
    %v827 = vpop.f32.mrb[0].mxu0
    %v828 = vadd.f32 0.0, %v827
    %v829 = vpop.f32.mrb[0].mxu0
    %830 = vdwg.mxu0
    %v831 = vadd.f32 %v748, %v828
    %s832 = scalar_lea.vmem [#allocation3], 192
    %v833 = vld [vmem:[%s832] sm:$0xff]
    %v834 = vld [vmem:[%s832 + $0x8] sm:$0xff]
    %v835 = vld [vmem:[%s832 + $0x10] sm:$0xff]
    %v836 = vld [vmem:[%s832 + $0x18] sm:$0xff]
    %v837 = vld [vmem:[%s832 + $0x20] sm:$0xff]
    %v838 = vld [vmem:[%s832 + $0x28] sm:$0xff]
    %v839 = vld [vmem:[%s832 + $0x30] sm:$0xff]
    %v840 = vld [vmem:[%s832 + $0x38] sm:$0xff]
    %v841 = vrot.slane %v571, 6
    %v842 = vsel %vm591, %v841, 0
    %844 = vmatprep.subr.mxu0 0.0
    %845 = vmatpush1.msra.mxu0 %v833
    %846 = vmatprep.subr.mxu0 0.0
    %847 = vmatpush1.msra.mxu0 %v834
    %848 = vmatprep.subr.mxu0 0.0
    %849 = vmatpush1.msra.mxu0 %v835
    %850 = vmatprep.subr.mxu0 0.0
    %851 = vmatpush1.msra.mxu0 %v836
    %852 = vmatprep.subr.mxu0 0.0
    %853 = vmatpush1.msra.mxu0 %v837
    %854 = vmatprep.subr.mxu0 0.0
    %855 = vmatpush1.msra.mxu0 %v838
    %856 = vmatprep.subr.mxu0 0.0
    %857 = vmatpush1.msra.mxu0 %v839
    %858 = vmatprep.subr.mxu0 0.0
    %859 = vmatpush1.msra.mxu0 %v840
    %860 = vmatprep.subr.mxu0 0.0
    %861 = vmatpush1.msra.mxu0 0.0
    %862 = vmatprep.subr.mxu0 0.0
    %863 = vmatpush1.msra.mxu0 0.0
    %864 = vmatprep.subr.mxu0 0.0
    %865 = vmatpush1.msra.mxu0 0.0
    %866 = vmatprep.subr.mxu0 0.0
    %867 = vmatpush1.msra.mxu0 0.0
    %868 = vmatprep.subr.mxu0 0.0
    %869 = vmatpush1.msra.mxu0 0.0
    %870 = vmatprep.subr.mxu0 0.0
    %871 = vmatpush1.msra.mxu0 0.0
    %872 = vmatprep.subr.mxu0 0.0
    %873 = vmatpush1.msra.mxu0 0.0
    %874 = vmatprep.subr.mxu0 0.0
    %875 = vmatpush1.msra.mxu0 0.0
    %876 = vmatprep.subr.mxu0 0.0
    %877 = vmatpush1.msra.mxu0 0.0
    %878 = vmatprep.subr.mxu0 0.0
    %879 = vmatpush1.msra.mxu0 0.0
    %880 = vmatprep.subr.mxu0 0.0
    %881 = vmatpush1.msra.mxu0 0.0
    %882 = vmatprep.subr.mxu0 0.0
    %883 = vmatpush1.msra.mxu0 0.0
    %884 = vmatprep.subr.mxu0 0.0
    %885 = vmatpush1.msra.mxu0 0.0
    %886 = vmatprep.subr.mxu0 0.0
    %887 = vmatpush1.msra.mxu0 0.0
    %888 = vmatprep.subr.mxu0 0.0
    %889 = vmatpush1.msra.mxu0 0.0
    %890 = vmatprep.subr.mxu0 0.0
    %891 = vmatpush1.msra.mxu0 0.0
    %892 = vmatprep.subr.mxu0 0.0
    %893 = vmatpush1.msra.mxu0 0.0
    %894 = vmatprep.subr.mxu0 0.0
    %895 = vmatpush1.msra.mxu0 0.0
    %896 = vmatprep.subr.mxu0 0.0
    %897 = vmatpush1.msra.mxu0 0.0
    %898 = vmatprep.subr.mxu0 0.0
    %899 = vmatpush1.msra.mxu0 0.0
    %900 = vmatprep.subr.mxu0 0.0
    %901 = vmatpush1.msra.mxu0 0.0
    %902 = vmatprep.subr.mxu0 0.0
    %903 = vmatpush1.msra.mxu0 0.0
    %904 = vmatprep.subr.mxu0 0.0
    %905 = vmatpush1.msra.mxu0 0.0
    %906 = vmatprep.subr.mxu0 0.0
    %907 = vmatpush1.msra.mxu0 0.0
    %908 = vmatprep.mubr.f32.mxu0 0.0
    %909 = vmatmul.mubr.f32.gmra.mrb[0].mxu0 %v842
    %v910 = vpop.f32.mrb[0].mxu0
    %v911 = vadd.f32 0.0, %v910
    %v912 = vpop.f32.mrb[0].mxu0
    %913 = vdwg.mxu0
    %v914 = vadd.f32 %v831, %v911
    %s915 = scalar_lea.vmem [#allocation3], 256
    %v916 = vld [vmem:[%s915] sm:$0xff]
    %v917 = vld [vmem:[%s915 + $0x8] sm:$0xff]
    %v918 = vld [vmem:[%s915 + $0x10] sm:$0xff]
    %v919 = vld [vmem:[%s915 + $0x18] sm:$0xff]
    %v920 = vld [vmem:[%s915 + $0x20] sm:$0xff]
    %v921 = vld [vmem:[%s915 + $0x28] sm:$0xff]
    %v922 = vld [vmem:[%s915 + $0x30] sm:$0xff]
    %v923 = vld [vmem:[%s915 + $0x38] sm:$0xff]
    %v925 = vsel %vm591, %v572, 0
    %927 = vmatprep.subr.mxu0 0.0
    %928 = vmatpush1.msra.mxu0 %v916
    %929 = vmatprep.subr.mxu0 0.0
    %930 = vmatpush1.msra.mxu0 %v917
    %931 = vmatprep.subr.mxu0 0.0
    %932 = vmatpush1.msra.mxu0 %v918
    %933 = vmatprep.subr.mxu0 0.0
    %934 = vmatpush1.msra.mxu0 %v919
    %935 = vmatprep.subr.mxu0 0.0
    %936 = vmatpush1.msra.mxu0 %v920
    %937 = vmatprep.subr.mxu0 0.0
    %938 = vmatpush1.msra.mxu0 %v921
    %939 = vmatprep.subr.mxu0 0.0
    %940 = vmatpush1.msra.mxu0 %v922
    %941 = vmatprep.subr.mxu0 0.0
    %942 = vmatpush1.msra.mxu0 %v923
    %943 = vmatprep.subr.mxu0 0.0
    %944 = vmatpush1.msra.mxu0 0.0
    %945 = vmatprep.subr.mxu0 0.0
    %946 = vmatpush1.msra.mxu0 0.0
    %947 = vmatprep.subr.mxu0 0.0
    %948 = vmatpush1.msra.mxu0 0.0
    %949 = vmatprep.subr.mxu0 0.0
    %950 = vmatpush1.msra.mxu0 0.0
    %951 = vmatprep.subr.mxu0 0.0
    %952 = vmatpush1.msra.mxu0 0.0
    %953 = vmatprep.subr.mxu0 0.0
    %954 = vmatpush1.msra.mxu0 0.0
    %955 = vmatprep.subr.mxu0 0.0
    %956 = vmatpush1.msra.mxu0 0.0
    %957 = vmatprep.subr.mxu0 0.0
    %958 = vmatpush1.msra.mxu0 0.0
    %959 = vmatprep.subr.mxu0 0.0
    %960 = vmatpush1.msra.mxu0 0.0
    %961 = vmatprep.subr.mxu0 0.0
    %962 = vmatpush1.msra.mxu0 0.0
    %963 = vmatprep.subr.mxu0 0.0
    %964 = vmatpush1.msra.mxu0 0.0
    %965 = vmatprep.subr.mxu0 0.0
    %966 = vmatpush1.msra.mxu0 0.0
    %967 = vmatprep.subr.mxu0 0.0
    %968 = vmatpush1.msra.mxu0 0.0
    %969 = vmatprep.subr.mxu0 0.0
    %970 = vmatpush1.msra.mxu0 0.0
    %971 = vmatprep.subr.mxu0 0.0
    %972 = vmatpush1.msra.mxu0 0.0
    %973 = vmatprep.subr.mxu0 0.0
    %974 = vmatpush1.msra.mxu0 0.0
    %975 = vmatprep.subr.mxu0 0.0
    %976 = vmatpush1.msra.mxu0 0.0
    %977 = vmatprep.subr.mxu0 0.0
    %978 = vmatpush1.msra.mxu0 0.0
    %979 = vmatprep.subr.mxu0 0.0
    %980 = vmatpush1.msra.mxu0 0.0
    %981 = vmatprep.subr.mxu0 0.0
    %982 = vmatpush1.msra.mxu0 0.0
    %983 = vmatprep.subr.mxu0 0.0
    %984 = vmatpush1.msra.mxu0 0.0
    %985 = vmatprep.subr.mxu0 0.0
    %986 = vmatpush1.msra.mxu0 0.0
    %987 = vmatprep.subr.mxu0 0.0
    %988 = vmatpush1.msra.mxu0 0.0
    %989 = vmatprep.subr.mxu0 0.0
    %990 = vmatpush1.msra.mxu0 0.0
    %991 = vmatprep.mubr.f32.mxu0 0.0
    %992 = vmatmul.mubr.f32.gmra.mrb[0].mxu0 %v925
    %v993 = vpop.f32.mrb[0].mxu0
    %v994 = vadd.f32 0.0, %v993
    %v995 = vpop.f32.mrb[0].mxu0
    %996 = vdwg.mxu0
    %v997 = vadd.f32 %v914, %v994
    %s998 = scalar_lea.vmem [#allocation3], 320
    %v999 = vld [vmem:[%s998] sm:$0xff]
    %v1000 = vld [vmem:[%s998 + $0x8] sm:$0xff]
    %v1001 = vld [vmem:[%s998 + $0x10] sm:$0xff]
    %v1002 = vld [vmem:[%s998 + $0x18] sm:$0xff]
    %v1003 = vld [vmem:[%s998 + $0x20] sm:$0xff]
    %v1004 = vld [vmem:[%s998 + $0x28] sm:$0xff]
    %v1005 = vld [vmem:[%s998 + $0x30] sm:$0xff]
    %v1006 = vld [vmem:[%s998 + $0x38] sm:$0xff]
    %v1007 = vrot.slane %v572, 2
    %v1008 = vsel %vm591, %v1007, 0
    %1010 = vmatprep.subr.mxu0 0.0
    %1011 = vmatpush1.msra.mxu0 %v999
    %1012 = vmatprep.subr.mxu0 0.0
    %1013 = vmatpush1.msra.mxu0 %v1000
    %1014 = vmatprep.subr.mxu0 0.0
    %1015 = vmatpush1.msra.mxu0 %v1001
    %1016 = vmatprep.subr.mxu0 0.0
    %1017 = vmatpush1.msra.mxu0 %v1002
    %1018 = vmatprep.subr.mxu0 0.0
    %1019 = vmatpush1.msra.mxu0 %v1003
    %1020 = vmatprep.subr.mxu0 0.0
    %1021 = vmatpush1.msra.mxu0 %v1004
    %1022 = vmatprep.subr.mxu0 0.0
    %1023 = vmatpush1.msra.mxu0 %v1005
    %1024 = vmatprep.subr.mxu0 0.0
    %1025 = vmatpush1.msra.mxu0 %v1006
    %1026 = vmatprep.subr.mxu0 0.0
    %1027 = vmatpush1.msra.mxu0 0.0
    %1028 = vmatprep.subr.mxu0 0.0
    %1029 = vmatpush1.msra.mxu0 0.0
    %1030 = vmatprep.subr.mxu0 0.0
    %1031 = vmatpush1.msra.mxu0 0.0
    %1032 = vmatprep.subr.mxu0 0.0
    %1033 = vmatpush1.msra.mxu0 0.0
    %1034 = vmatprep.subr.mxu0 0.0
    %1035 = vmatpush1.msra.mxu0 0.0
    %1036 = vmatprep.subr.mxu0 0.0
    %1037 = vmatpush1.msra.mxu0 0.0
    %1038 = vmatprep.subr.mxu0 0.0
    %1039 = vmatpush1.msra.mxu0 0.0
    %1040 = vmatprep.subr.mxu0 0.0
    %1041 = vmatpush1.msra.mxu0 0.0
    %1042 = vmatprep.subr.mxu0 0.0
    %1043 = vmatpush1.msra.mxu0 0.0
    %1044 = vmatprep.subr.mxu0 0.0
    %1045 = vmatpush1.msra.mxu0 0.0
    %1046 = vmatprep.subr.mxu0 0.0
    %1047 = vmatpush1.msra.mxu0 0.0
    %1048 = vmatprep.subr.mxu0 0.0
    %1049 = vmatpush1.msra.mxu0 0.0
    %1050 = vmatprep.subr.mxu0 0.0
    %1051 = vmatpush1.msra.mxu0 0.0
    %1052 = vmatprep.subr.mxu0 0.0
    %1053 = vmatpush1.msra.mxu0 0.0
    %1054 = vmatprep.subr.mxu0 0.0
    %1055 = vmatpush1.msra.mxu0 0.0
    %1056 = vmatprep.subr.mxu0 0.0
    %1057 = vmatpush1.msra.mxu0 0.0
    %1058 = vmatprep.subr.mxu0 0.0
    %1059 = vmatpush1.msra.mxu0 0.0
    %1060 = vmatprep.subr.mxu0 0.0
    %1061 = vmatpush1.msra.mxu0 0.0
    %1062 = vmatprep.subr.mxu0 0.0
    %1063 = vmatpush1.msra.mxu0 0.0
    %1064 = vmatprep.subr.mxu0 0.0
    %1065 = vmatpush1.msra.mxu0 0.0
    %1066 = vmatprep.subr.mxu0 0.0
    %1067 = vmatpush1.msra.mxu0 0.0
    %1068 = vmatprep.subr.mxu0 0.0
    %1069 = vmatpush1.msra.mxu0 0.0
    %1070 = vmatprep.subr.mxu0 0.0
    %1071 = vmatpush1.msra.mxu0 0.0
    %1072 = vmatprep.subr.mxu0 0.0
    %1073 = vmatpush1.msra.mxu0 0.0
    %1074 = vmatprep.mubr.f32.mxu0 0.0
    %1075 = vmatmul.mubr.f32.gmra.mrb[0].mxu0 %v1008
    %v1076 = vpop.f32.mrb[0].mxu0
    %v1077 = vadd.f32 0.0, %v1076
    %v1078 = vpop.f32.mrb[0].mxu0
    %1079 = vdwg.mxu0
    %v1080 = vadd.f32 %v997, %v1077
    %s1081 = scalar_lea.vmem [#allocation3], 384
    %v1082 = vld [vmem:[%s1081] sm:$0xff]
    %v1083 = vld [vmem:[%s1081 + $0x8] sm:$0xff]
    %v1084 = vld [vmem:[%s1081 + $0x10] sm:$0xff]
    %v1085 = vld [vmem:[%s1081 + $0x18] sm:$0xff]
    %v1086 = vld [vmem:[%s1081 + $0x20] sm:$0xff]
    %v1087 = vld [vmem:[%s1081 + $0x28] sm:$0xff]
    %v1088 = vld [vmem:[%s1081 + $0x30] sm:$0xff]
    %v1089 = vld [vmem:[%s1081 + $0x38] sm:$0xff]
    %v1090 = vrot.slane %v572, 4
    %v1091 = vsel %vm591, %v1090, 0
    %1093 = vmatprep.subr.mxu0 0.0
    %1094 = vmatpush1.msra.mxu0 %v1082
    %1095 = vmatprep.subr.mxu0 0.0
    %1096 = vmatpush1.msra.mxu0 %v1083
    %1097 = vmatprep.subr.mxu0 0.0
    %1098 = vmatpush1.msra.mxu0 %v1084
    %1099 = vmatprep.subr.mxu0 0.0
    %1100 = vmatpush1.msra.mxu0 %v1085
    %1101 = vmatprep.subr.mxu0 0.0
    %1102 = vmatpush1.msra.mxu0 %v1086
    %1103 = vmatprep.subr.mxu0 0.0
    %1104 = vmatpush1.msra.mxu0 %v1087
    %1105 = vmatprep.subr.mxu0 0.0
    %1106 = vmatpush1.msra.mxu0 %v1088
    %1107 = vmatprep.subr.mxu0 0.0
    %1108 = vmatpush1.msra.mxu0 %v1089
    %1109 = vmatprep.subr.mxu0 0.0
    %1110 = vmatpush1.msra.mxu0 0.0
    %1111 = vmatprep.subr.mxu0 0.0
    %1112 = vmatpush1.msra.mxu0 0.0
    %1113 = vmatprep.subr.mxu0 0.0
    %1114 = vmatpush1.msra.mxu0 0.0
    %1115 = vmatprep.subr.mxu0 0.0
    %1116 = vmatpush1.msra.mxu0 0.0
    %1117 = vmatprep.subr.mxu0 0.0
    %1118 = vmatpush1.msra.mxu0 0.0
    %1119 = vmatprep.subr.mxu0 0.0
    %1120 = vmatpush1.msra.mxu0 0.0
    %1121 = vmatprep.subr.mxu0 0.0
    %1122 = vmatpush1.msra.mxu0 0.0
    %1123 = vmatprep.subr.mxu0 0.0
    %1124 = vmatpush1.msra.mxu0 0.0
    %1125 = vmatprep.subr.mxu0 0.0
    %1126 = vmatpush1.msra.mxu0 0.0
    %1127 = vmatprep.subr.mxu0 0.0
    %1128 = vmatpush1.msra.mxu0 0.0
    %1129 = vmatprep.subr.mxu0 0.0
    %1130 = vmatpush1.msra.mxu0 0.0
    %1131 = vmatprep.subr.mxu0 0.0
    %1132 = vmatpush1.msra.mxu0 0.0
    %1133 = vmatprep.subr.mxu0 0.0
    %1134 = vmatpush1.msra.mxu0 0.0
    %1135 = vmatprep.subr.mxu0 0.0
    %1136 = vmatpush1.msra.mxu0 0.0
    %1137 = vmatprep.subr.mxu0 0.0
    %1138 = vmatpush1.msra.mxu0 0.0
    %1139 = vmatprep.subr.mxu0 0.0
    %1140 = vmatpush1.msra.mxu0 0.0
    %1141 = vmatprep.subr.mxu0 0.0
    %1142 = vmatpush1.msra.mxu0 0.0
    %1143 = vmatprep.subr.mxu0 0.0
    %1144 = vmatpush1.msra.mxu0 0.0
    %1145 = vmatprep.subr.mxu0 0.0
    %1146 = vmatpush1.msra.mxu0 0.0
    %1147 = vmatprep.subr.mxu0 0.0
    %1148 = vmatpush1.msra.mxu0 0.0
    %1149 = vmatprep.subr.mxu0 0.0
    %1150 = vmatpush1.msra.mxu0 0.0
    %1151 = vmatprep.subr.mxu0 0.0
    %1152 = vmatpush1.msra.mxu0 0.0
    %1153 = vmatprep.subr.mxu0 0.0
    %1154 = vmatpush1.msra.mxu0 0.0
    %1155 = vmatprep.subr.mxu0 0.0
    %1156 = vmatpush1.msra.mxu0 0.0
    %1157 = vmatprep.mubr.f32.mxu0 0.0
    %1158 = vmatmul.mubr.f32.gmra.mrb[0].mxu0 %v1091
    %v1159 = vpop.f32.mrb[0].mxu0
    %v1160 = vadd.f32 0.0, %v1159
    %v1161 = vpop.f32.mrb[0].mxu0
    %1162 = vdwg.mxu0
    %v1163 = vadd.f32 %v1080, %v1160
    %s1164 = scalar_lea.vmem [#allocation3], 448
    %v1165 = vld [vmem:[%s1164] sm:$0xff]
    %v1166 = vld [vmem:[%s1164 + $0x8] sm:$0xff]
    %v1167 = vld [vmem:[%s1164 + $0x10] sm:$0xff]
    %v1168 = vld [vmem:[%s1164 + $0x18] sm:$0xff]
    %v1169 = vld [vmem:[%s1164 + $0x20] sm:$0xff]
    %v1170 = vld [vmem:[%s1164 + $0x28] sm:$0xff]
    %v1171 = vld [vmem:[%s1164 + $0x30] sm:$0xff]
    %v1172 = vld [vmem:[%s1164 + $0x38] sm:$0xff]
    %v1173 = vrot.slane %v572, 6
    %v1174 = vsel %vm591, %v1173, 0
    %1176 = vmatprep.subr.mxu0 0.0
    %1177 = vmatpush1.msra.mxu0 %v1165
    %1178 = vmatprep.subr.mxu0 0.0
    %1179 = vmatpush1.msra.mxu0 %v1166
    %1180 = vmatprep.subr.mxu0 0.0
    %1181 = vmatpush1.msra.mxu0 %v1167
    %1182 = vmatprep.subr.mxu0 0.0
    %1183 = vmatpush1.msra.mxu0 %v1168
    %1184 = vmatprep.subr.mxu0 0.0
    %1185 = vmatpush1.msra.mxu0 %v1169
    %1186 = vmatprep.subr.mxu0 0.0
    %1187 = vmatpush1.msra.mxu0 %v1170
    %1188 = vmatprep.subr.mxu0 0.0
    %1189 = vmatpush1.msra.mxu0 %v1171
    %1190 = vmatprep.subr.mxu0 0.0
    %1191 = vmatpush1.msra.mxu0 %v1172
    %1192 = vmatprep.subr.mxu0 0.0
    %1193 = vmatpush1.msra.mxu0 0.0
    %1194 = vmatprep.subr.mxu0 0.0
    %1195 = vmatpush1.msra.mxu0 0.0
    %1196 = vmatprep.subr.mxu0 0.0
    %1197 = vmatpush1.msra.mxu0 0.0
    %1198 = vmatprep.subr.mxu0 0.0
    %1199 = vmatpush1.msra.mxu0 0.0
    %1200 = vmatprep.subr.mxu0 0.0
    %1201 = vmatpush1.msra.mxu0 0.0
    %1202 = vmatprep.subr.mxu0 0.0
    %1203 = vmatpush1.msra.mxu0 0.0
    %1204 = vmatprep.subr.mxu0 0.0
    %1205 = vmatpush1.msra.mxu0 0.0
    %1206 = vmatprep.subr.mxu0 0.0
    %1207 = vmatpush1.msra.mxu0 0.0
    %1208 = vmatprep.subr.mxu0 0.0
    %1209 = vmatpush1.msra.mxu0 0.0
    %1210 = vmatprep.subr.mxu0 0.0
    %1211 = vmatpush1.msra.mxu0 0.0
    %1212 = vmatprep.subr.mxu0 0.0
    %1213 = vmatpush1.msra.mxu0 0.0
    %1214 = vmatprep.subr.mxu0 0.0
    %1215 = vmatpush1.msra.mxu0 0.0
    %1216 = vmatprep.subr.mxu0 0.0
    %1217 = vmatpush1.msra.mxu0 0.0
    %1218 = vmatprep.subr.mxu0 0.0
    %1219 = vmatpush1.msra.mxu0 0.0
    %1220 = vmatprep.subr.mxu0 0.0
    %1221 = vmatpush1.msra.mxu0 0.0
    %1222 = vmatprep.subr.mxu0 0.0
    %1223 = vmatpush1.msra.mxu0 0.0
    %1224 = vmatprep.subr.mxu0 0.0
    %1225 = vmatpush1.msra.mxu0 0.0
    %1226 = vmatprep.subr.mxu0 0.0
    %1227 = vmatpush1.msra.mxu0 0.0
    %1228 = vmatprep.subr.mxu0 0.0
    %1229 = vmatpush1.msra.mxu0 0.0
    %1230 = vmatprep.subr.mxu0 0.0
    %1231 = vmatpush1.msra.mxu0 0.0
    %1232 = vmatprep.subr.mxu0 0.0
    %1233 = vmatpush1.msra.mxu0 0.0
    %1234 = vmatprep.subr.mxu0 0.0
    %1235 = vmatpush1.msra.mxu0 0.0
    %1236 = vmatprep.subr.mxu0 0.0
    %1237 = vmatpush1.msra.mxu0 0.0
    %1238 = vmatprep.subr.mxu0 0.0
    %1239 = vmatpush1.msra.mxu0 0.0
    %1240 = vmatprep.mubr.f32.mxu0 0.0
    %1241 = vmatmul.mubr.f32.gmra.mrb[0].mxu0 %v1174
    %v1242 = vpop.f32.mrb[0].mxu0
    %v1243 = vadd.f32 0.0, %v1242
    %v1244 = vpop.f32.mrb[0].mxu0
    %1245 = vdwg.mxu0
    %v1246 = vadd.f32 %v1163, %v1243
    %s1247 = scalar_lea.vmem [#allocation3], 512
    %v1248 = vld [vmem:[%s1247] sm:$0xff]
    %v1249 = vld [vmem:[%s1247 + $0x8] sm:$0xff]
    %v1250 = vld [vmem:[%s1247 + $0x10] sm:$0xff]
    %v1251 = vld [vmem:[%s1247 + $0x18] sm:$0xff]
    %v1252 = vld [vmem:[%s1247 + $0x20] sm:$0xff]
    %v1253 = vld [vmem:[%s1247 + $0x28] sm:$0xff]
    %v1254 = vld [vmem:[%s1247 + $0x30] sm:$0xff]
    %v1255 = vld [vmem:[%s1247 + $0x38] sm:$0xff]
    %v1257 = vsel %vm591, %v573, 0
    %1259 = vmatprep.subr.mxu0 0.0
    %1260 = vmatpush1.msra.mxu0 %v1248
    %1261 = vmatprep.subr.mxu0 0.0
    %1262 = vmatpush1.msra.mxu0 %v1249
    %1263 = vmatprep.subr.mxu0 0.0
    %1264 = vmatpush1.msra.mxu0 %v1250
    %1265 = vmatprep.subr.mxu0 0.0
    %1266 = vmatpush1.msra.mxu0 %v1251
    %1267 = vmatprep.subr.mxu0 0.0
    %1268 = vmatpush1.msra.mxu0 %v1252
    %1269 = vmatprep.subr.mxu0 0.0
    %1270 = vmatpush1.msra.mxu0 %v1253
    %1271 = vmatprep.subr.mxu0 0.0
    %1272 = vmatpush1.msra.mxu0 %v1254
    %1273 = vmatprep.subr.mxu0 0.0
    %1274 = vmatpush1.msra.mxu0 %v1255
    %1275 = vmatprep.subr.mxu0 0.0
    %1276 = vmatpush1.msra.mxu0 0.0
    %1277 = vmatprep.subr.mxu0 0.0
    %1278 = vmatpush1.msra.mxu0 0.0
    %1279 = vmatprep.subr.mxu0 0.0
    %1280 = vmatpush1.msra.mxu0 0.0
    %1281 = vmatprep.subr.mxu0 0.0
    %1282 = vmatpush1.msra.mxu0 0.0
    %1283 = vmatprep.subr.mxu0 0.0
    %1284 = vmatpush1.msra.mxu0 0.0
    %1285 = vmatprep.subr.mxu0 0.0
    %1286 = vmatpush1.msra.mxu0 0.0
    %1287 = vmatprep.subr.mxu0 0.0
    %1288 = vmatpush1.msra.mxu0 0.0
    %1289 = vmatprep.subr.mxu0 0.0
    %1290 = vmatpush1.msra.mxu0 0.0
    %1291 = vmatprep.subr.mxu0 0.0
    %1292 = vmatpush1.msra.mxu0 0.0
    %1293 = vmatprep.subr.mxu0 0.0
    %1294 = vmatpush1.msra.mxu0 0.0
    %1295 = vmatprep.subr.mxu0 0.0
    %1296 = vmatpush1.msra.mxu0 0.0
    %1297 = vmatprep.subr.mxu0 0.0
    %1298 = vmatpush1.msra.mxu0 0.0
    %1299 = vmatprep.subr.mxu0 0.0
    %1300 = vmatpush1.msra.mxu0 0.0
    %1301 = vmatprep.subr.mxu0 0.0
    %1302 = vmatpush1.msra.mxu0 0.0
    %1303 = vmatprep.subr.mxu0 0.0
    %1304 = vmatpush1.msra.mxu0 0.0
    %1305 = vmatprep.subr.mxu0 0.0
    %1306 = vmatpush1.msra.mxu0 0.0
    %1307 = vmatprep.subr.mxu0 0.0
    %1308 = vmatpush1.msra.mxu0 0.0
    %1309 = vmatprep.subr.mxu0 0.0
    %1310 = vmatpush1.msra.mxu0 0.0
    %1311 = vmatprep.subr.mxu0 0.0
    %1312 = vmatpush1.msra.mxu0 0.0
    %1313 = vmatprep.subr.mxu0 0.0
    %1314 = vmatpush1.msra.mxu0 0.0
    %1315 = vmatprep.subr.mxu0 0.0
    %1316 = vmatpush1.msra.mxu0 0.0
    %1317 = vmatprep.subr.mxu0 0.0
    %1318 = vmatpush1.msra.mxu0 0.0
    %1319 = vmatprep.subr.mxu0 0.0
    %1320 = vmatpush1.msra.mxu0 0.0
    %1321 = vmatprep.subr.mxu0 0.0
    %1322 = vmatpush1.msra.mxu0 0.0
    %1323 = vmatprep.mubr.f32.mxu0 0.0
    %1324 = vmatmul.mubr.f32.gmra.mrb[0].mxu0 %v1257
    %v1325 = vpop.f32.mrb[0].mxu0
    %v1326 = vadd.f32 0.0, %v1325
    %v1327 = vpop.f32.mrb[0].mxu0
    %1328 = vdwg.mxu0
    %v1329 = vadd.f32 %v1246, %v1326
    %s1330 = scalar_lea.vmem [#allocation3], 576
    %v1331 = vld [vmem:[%s1330] sm:$0xff]
    %v1332 = vld [vmem:[%s1330 + $0x8] sm:$0xff]
    %v1333 = vld [vmem:[%s1330 + $0x10] sm:$0xff]
    %v1334 = vld [vmem:[%s1330 + $0x18] sm:$0xff]
    %v1335 = vld [vmem:[%s1330 + $0x20] sm:$0xff]
    %v1336 = vld [vmem:[%s1330 + $0x28] sm:$0xff]
    %v1337 = vld [vmem:[%s1330 + $0x30] sm:$0xff]
    %v1338 = vld [vmem:[%s1330 + $0x38] sm:$0xff]
    %v1339 = vrot.slane %v573, 2
    %v1340 = vsel %vm591, %v1339, 0
    %1342 = vmatprep.subr.mxu0 0.0
    %1343 = vmatpush1.msra.mxu0 %v1331
    %1344 = vmatprep.subr.mxu0 0.0
    %1345 = vmatpush1.msra.mxu0 %v1332
    %1346 = vmatprep.subr.mxu0 0.0
    %1347 = vmatpush1.msra.mxu0 %v1333
    %1348 = vmatprep.subr.mxu0 0.0
    %1349 = vmatpush1.msra.mxu0 %v1334
    %1350 = vmatprep.subr.mxu0 0.0
    %1351 = vmatpush1.msra.mxu0 %v1335
    %1352 = vmatprep.subr.mxu0 0.0
    %1353 = vmatpush1.msra.mxu0 %v1336
    %1354 = vmatprep.subr.mxu0 0.0
    %1355 = vmatpush1.msra.mxu0 %v1337
    %1356 = vmatprep.subr.mxu0 0.0
    %1357 = vmatpush1.msra.mxu0 %v1338
    %1358 = vmatprep.subr.mxu0 0.0
    %1359 = vmatpush1.msra.mxu0 0.0
    %1360 = vmatprep.subr.mxu0 0.0
    %1361 = vmatpush1.msra.mxu0 0.0
    %1362 = vmatprep.subr.mxu0 0.0
    %1363 = vmatpush1.msra.mxu0 0.0
    %1364 = vmatprep.subr.mxu0 0.0
    %1365 = vmatpush1.msra.mxu0 0.0
    %1366 = vmatprep.subr.mxu0 0.0
    %1367 = vmatpush1.msra.mxu0 0.0
    %1368 = vmatprep.subr.mxu0 0.0
    %1369 = vmatpush1.msra.mxu0 0.0
    %1370 = vmatprep.subr.mxu0 0.0
    %1371 = vmatpush1.msra.mxu0 0.0
    %1372 = vmatprep.subr.mxu0 0.0
    %1373 = vmatpush1.msra.mxu0 0.0
    %1374 = vmatprep.subr.mxu0 0.0
    %1375 = vmatpush1.msra.mxu0 0.0
    %1376 = vmatprep.subr.mxu0 0.0
    %1377 = vmatpush1.msra.mxu0 0.0
    %1378 = vmatprep.subr.mxu0 0.0
    %1379 = vmatpush1.msra.mxu0 0.0
    %1380 = vmatprep.subr.mxu0 0.0
    %1381 = vmatpush1.msra.mxu0 0.0
    %1382 = vmatprep.subr.mxu0 0.0
    %1383 = vmatpush1.msra.mxu0 0.0
    %1384 = vmatprep.subr.mxu0 0.0
    %1385 = vmatpush1.msra.mxu0 0.0
    %1386 = vmatprep.subr.mxu0 0.0
    %1387 = vmatpush1.msra.mxu0 0.0
    %1388 = vmatprep.subr.mxu0 0.0
    %1389 = vmatpush1.msra.mxu0 0.0
    %1390 = vmatprep.subr.mxu0 0.0
    %1391 = vmatpush1.msra.mxu0 0.0
    %1392 = vmatprep.subr.mxu0 0.0
    %1393 = vmatpush1.msra.mxu0 0.0
    %1394 = vmatprep.subr.mxu0 0.0
    %1395 = vmatpush1.msra.mxu0 0.0
    %1396 = vmatprep.subr.mxu0 0.0
    %1397 = vmatpush1.msra.mxu0 0.0
    %1398 = vmatprep.subr.mxu0 0.0
    %1399 = vmatpush1.msra.mxu0 0.0
    %1400 = vmatprep.subr.mxu0 0.0
    %1401 = vmatpush1.msra.mxu0 0.0
    %1402 = vmatprep.subr.mxu0 0.0
    %1403 = vmatpush1.msra.mxu0 0.0
    %1404 = vmatprep.subr.mxu0 0.0
    %1405 = vmatpush1.msra.mxu0 0.0
    %1406 = vmatprep.mubr.f32.mxu0 0.0
    %1407 = vmatmul.mubr.f32.gmra.mrb[0].mxu0 %v1340
    %v1408 = vpop.f32.mrb[0].mxu0
    %v1409 = vadd.f32 0.0, %v1408
    %v1410 = vpop.f32.mrb[0].mxu0
    %1411 = vdwg.mxu0
    %v1412 = vadd.f32 %v1329, %v1409
    %s1413 = scalar_lea.vmem [#allocation3], 640
    %v1414 = vld [vmem:[%s1413] sm:$0xff]
    %v1415 = vld [vmem:[%s1413 + $0x8] sm:$0xff]
    %v1416 = vld [vmem:[%s1413 + $0x10] sm:$0xff]
    %v1417 = vld [vmem:[%s1413 + $0x18] sm:$0xff]
    %v1418 = vld [vmem:[%s1413 + $0x20] sm:$0xff]
    %v1419 = vld [vmem:[%s1413 + $0x28] sm:$0xff]
    %v1420 = vld [vmem:[%s1413 + $0x30] sm:$0xff]
    %v1421 = vld [vmem:[%s1413 + $0x38] sm:$0xff]
    %v1422 = vrot.slane %v573, 4
    %v1423 = vsel %vm591, %v1422, 0
    %1425 = vmatprep.subr.mxu0 0.0
    %1426 = vmatpush1.msra.mxu0 %v1414
    %1427 = vmatprep.subr.mxu0 0.0
    %1428 = vmatpush1.msra.mxu0 %v1415
    %1429 = vmatprep.subr.mxu0 0.0
    %1430 = vmatpush1.msra.mxu0 %v1416
    %1431 = vmatprep.subr.mxu0 0.0
    %1432 = vmatpush1.msra.mxu0 %v1417
    %1433 = vmatprep.subr.mxu0 0.0
    %1434 = vmatpush1.msra.mxu0 %v1418
    %1435 = vmatprep.subr.mxu0 0.0
    %1436 = vmatpush1.msra.mxu0 %v1419
    %1437 = vmatprep.subr.mxu0 0.0
    %1438 = vmatpush1.msra.mxu0 %v1420
    %1439 = vmatprep.subr.mxu0 0.0
    %1440 = vmatpush1.msra.mxu0 %v1421
    %1441 = vmatprep.subr.mxu0 0.0
    %1442 = vmatpush1.msra.mxu0 0.0
    %1443 = vmatprep.subr.mxu0 0.0
    %1444 = vmatpush1.msra.mxu0 0.0
    %1445 = vmatprep.subr.mxu0 0.0
    %1446 = vmatpush1.msra.mxu0 0.0
    %1447 = vmatprep.subr.mxu0 0.0
    %1448 = vmatpush1.msra.mxu0 0.0
    %1449 = vmatprep.subr.mxu0 0.0
    %1450 = vmatpush1.msra.mxu0 0.0
    %1451 = vmatprep.subr.mxu0 0.0
    %1452 = vmatpush1.msra.mxu0 0.0
    %1453 = vmatprep.subr.mxu0 0.0
    %1454 = vmatpush1.msra.mxu0 0.0
    %1455 = vmatprep.subr.mxu0 0.0
    %1456 = vmatpush1.msra.mxu0 0.0
    %1457 = vmatprep.subr.mxu0 0.0
    %1458 = vmatpush1.msra.mxu0 0.0
    %1459 = vmatprep.subr.mxu0 0.0
    %1460 = vmatpush1.msra.mxu0 0.0
    %1461 = vmatprep.subr.mxu0 0.0
    %1462 = vmatpush1.msra.mxu0 0.0
    %1463 = vmatprep.subr.mxu0 0.0
    %1464 = vmatpush1.msra.mxu0 0.0
    %1465 = vmatprep.subr.mxu0 0.0
    %1466 = vmatpush1.msra.mxu0 0.0
    %1467 = vmatprep.subr.mxu0 0.0
    %1468 = vmatpush1.msra.mxu0 0.0
    %1469 = vmatprep.subr.mxu0 0.0
    %1470 = vmatpush1.msra.mxu0 0.0
    %1471 = vmatprep.subr.mxu0 0.0
    %1472 = vmatpush1.msra.mxu0 0.0
    %1473 = vmatprep.subr.mxu0 0.0
    %1474 = vmatpush1.msra.mxu0 0.0
    %1475 = vmatprep.subr.mxu0 0.0
    %1476 = vmatpush1.msra.mxu0 0.0
    %1477 = vmatprep.subr.mxu0 0.0
    %1478 = vmatpush1.msra.mxu0 0.0
    %1479 = vmatprep.subr.mxu0 0.0
    %1480 = vmatpush1.msra.mxu0 0.0
    %1481 = vmatprep.subr.mxu0 0.0
    %1482 = vmatpush1.msra.mxu0 0.0
    %1483 = vmatprep.subr.mxu0 0.0
    %1484 = vmatpush1.msra.mxu0 0.0
    %1485 = vmatprep.subr.mxu0 0.0
    %1486 = vmatpush1.msra.mxu0 0.0
    %1487 = vmatprep.subr.mxu0 0.0
    %1488 = vmatpush1.msra.mxu0 0.0
    %1489 = vmatprep.mubr.f32.mxu0 0.0
    %1490 = vmatmul.mubr.f32.gmra.mrb[0].mxu0 %v1423
    %v1491 = vpop.f32.mrb[0].mxu0
    %v1492 = vadd.f32 0.0, %v1491
    %v1493 = vpop.f32.mrb[0].mxu0
    %1494 = vdwg.mxu0
    %v1495 = vadd.f32 %v1412, %v1492
    %s1496 = scalar_lea.vmem [#allocation3], 704
    %v1497 = vld [vmem:[%s1496] sm:$0xff]
    %v1498 = vld [vmem:[%s1496 + $0x8] sm:$0xff]
    %v1499 = vld [vmem:[%s1496 + $0x10] sm:$0xff]
    %v1500 = vld [vmem:[%s1496 + $0x18] sm:$0xff]
    %v1501 = vld [vmem:[%s1496 + $0x20] sm:$0xff]
    %v1502 = vld [vmem:[%s1496 + $0x28] sm:$0xff]
    %v1503 = vld [vmem:[%s1496 + $0x30] sm:$0xff]
    %v1504 = vld [vmem:[%s1496 + $0x38] sm:$0xff]
    %v1505 = vrot.slane %v573, 6
    %v1506 = vsel %vm591, %v1505, 0
    %1508 = vmatprep.subr.mxu0 0.0
    %1509 = vmatpush1.msra.mxu0 %v1497
    %1510 = vmatprep.subr.mxu0 0.0
    %1511 = vmatpush1.msra.mxu0 %v1498
    %1512 = vmatprep.subr.mxu0 0.0
    %1513 = vmatpush1.msra.mxu0 %v1499
    %1514 = vmatprep.subr.mxu0 0.0
    %1515 = vmatpush1.msra.mxu0 %v1500
    %1516 = vmatprep.subr.mxu0 0.0
    %1517 = vmatpush1.msra.mxu0 %v1501
    %1518 = vmatprep.subr.mxu0 0.0
    %1519 = vmatpush1.msra.mxu0 %v1502
    %1520 = vmatprep.subr.mxu0 0.0
    %1521 = vmatpush1.msra.mxu0 %v1503
    %1522 = vmatprep.subr.mxu0 0.0
    %1523 = vmatpush1.msra.mxu0 %v1504
    %1524 = vmatprep.subr.mxu0 0.0
    %1525 = vmatpush1.msra.mxu0 0.0
    %1526 = vmatprep.subr.mxu0 0.0
    %1527 = vmatpush1.msra.mxu0 0.0
    %1528 = vmatprep.subr.mxu0 0.0
    %1529 = vmatpush1.msra.mxu0 0.0
    %1530 = vmatprep.subr.mxu0 0.0
    %1531 = vmatpush1.msra.mxu0 0.0
    %1532 = vmatprep.subr.mxu0 0.0
    %1533 = vmatpush1.msra.mxu0 0.0
    %1534 = vmatprep.subr.mxu0 0.0
    %1535 = vmatpush1.msra.mxu0 0.0
    %1536 = vmatprep.subr.mxu0 0.0
    %1537 = vmatpush1.msra.mxu0 0.0
    %1538 = vmatprep.subr.mxu0 0.0
    %1539 = vmatpush1.msra.mxu0 0.0
    %1540 = vmatprep.subr.mxu0 0.0
    %1541 = vmatpush1.msra.mxu0 0.0
    %1542 = vmatprep.subr.mxu0 0.0
    %1543 = vmatpush1.msra.mxu0 0.0
    %1544 = vmatprep.subr.mxu0 0.0
    %1545 = vmatpush1.msra.mxu0 0.0
    %1546 = vmatprep.subr.mxu0 0.0
    %1547 = vmatpush1.msra.mxu0 0.0
    %1548 = vmatprep.subr.mxu0 0.0
    %1549 = vmatpush1.msra.mxu0 0.0
    %1550 = vmatprep.subr.mxu0 0.0
    %1551 = vmatpush1.msra.mxu0 0.0
    %1552 = vmatprep.subr.mxu0 0.0
    %1553 = vmatpush1.msra.mxu0 0.0
    %1554 = vmatprep.subr.mxu0 0.0
    %1555 = vmatpush1.msra.mxu0 0.0
    %1556 = vmatprep.subr.mxu0 0.0
    %1557 = vmatpush1.msra.mxu0 0.0
    %1558 = vmatprep.subr.mxu0 0.0
    %1559 = vmatpush1.msra.mxu0 0.0
    %1560 = vmatprep.subr.mxu0 0.0
    %1561 = vmatpush1.msra.mxu0 0.0
    %1562 = vmatprep.subr.mxu0 0.0
    %1563 = vmatpush1.msra.mxu0 0.0
    %1564 = vmatprep.subr.mxu0 0.0
    %1565 = vmatpush1.msra.mxu0 0.0
    %1566 = vmatprep.subr.mxu0 0.0
    %1567 = vmatpush1.msra.mxu0 0.0
    %1568 = vmatprep.subr.mxu0 0.0
    %1569 = vmatpush1.msra.mxu0 0.0
    %1570 = vmatprep.subr.mxu0 0.0
    %1571 = vmatpush1.msra.mxu0 0.0
    %1572 = vmatprep.mubr.f32.mxu0 0.0
    %1573 = vmatmul.mubr.f32.gmra.mrb[0].mxu0 %v1506
    %v1574 = vpop.f32.mrb[0].mxu0
    %v1575 = vadd.f32 0.0, %v1574
    %v1576 = vpop.f32.mrb[0].mxu0
    %1577 = vdwg.mxu0
    %v1578 = vadd.f32 %v1495, %v1575
    %s1579 = scalar_lea.vmem [#allocation3], 768
    %v1580 = vld [vmem:[%s1579] sm:$0xff]
    %v1581 = vld [vmem:[%s1579 + $0x8] sm:$0xff]
    %v1582 = vld [vmem:[%s1579 + $0x10] sm:$0xff]
    %v1583 = vld [vmem:[%s1579 + $0x18] sm:$0xff]
    %v1584 = vld [vmem:[%s1579 + $0x20] sm:$0xff]
    %v1585 = vld [vmem:[%s1579 + $0x28] sm:$0xff]
    %v1586 = vld [vmem:[%s1579 + $0x30] sm:$0xff]
    %v1587 = vld [vmem:[%s1579 + $0x38] sm:$0xff]
    %v1589 = vsel %vm591, %v574, 0
    %1591 = vmatprep.subr.mxu0 0.0
    %1592 = vmatpush1.msra.mxu0 %v1580
    %1593 = vmatprep.subr.mxu0 0.0
    %1594 = vmatpush1.msra.mxu0 %v1581
    %1595 = vmatprep.subr.mxu0 0.0
    %1596 = vmatpush1.msra.mxu0 %v1582
    %1597 = vmatprep.subr.mxu0 0.0
    %1598 = vmatpush1.msra.mxu0 %v1583
    %1599 = vmatprep.subr.mxu0 0.0
    %1600 = vmatpush1.msra.mxu0 %v1584
    %1601 = vmatprep.subr.mxu0 0.0
    %1602 = vmatpush1.msra.mxu0 %v1585
    %1603 = vmatprep.subr.mxu0 0.0
    %1604 = vmatpush1.msra.mxu0 %v1586
    %1605 = vmatprep.subr.mxu0 0.0
    %1606 = vmatpush1.msra.mxu0 %v1587
    %1607 = vmatprep.subr.mxu0 0.0
    %1608 = vmatpush1.msra.mxu0 0.0
    %1609 = vmatprep.subr.mxu0 0.0
    %1610 = vmatpush1.msra.mxu0 0.0
    %1611 = vmatprep.subr.mxu0 0.0
    %1612 = vmatpush1.msra.mxu0 0.0
    %1613 = vmatprep.subr.mxu0 0.0
    %1614 = vmatpush1.msra.mxu0 0.0
    %1615 = vmatprep.subr.mxu0 0.0
    %1616 = vmatpush1.msra.mxu0 0.0
    %1617 = vmatprep.subr.mxu0 0.0
    %1618 = vmatpush1.msra.mxu0 0.0
    %1619 = vmatprep.subr.mxu0 0.0
    %1620 = vmatpush1.msra.mxu0 0.0
    %1621 = vmatprep.subr.mxu0 0.0
    %1622 = vmatpush1.msra.mxu0 0.0
    %1623 = vmatprep.subr.mxu0 0.0
    %1624 = vmatpush1.msra.mxu0 0.0
    %1625 = vmatprep.subr.mxu0 0.0
    %1626 = vmatpush1.msra.mxu0 0.0
    %1627 = vmatprep.subr.mxu0 0.0
    %1628 = vmatpush1.msra.mxu0 0.0
    %1629 = vmatprep.subr.mxu0 0.0
    %1630 = vmatpush1.msra.mxu0 0.0
    %1631 = vmatprep.subr.mxu0 0.0
    %1632 = vmatpush1.msra.mxu0 0.0
    %1633 = vmatprep.subr.mxu0 0.0
    %1634 = vmatpush1.msra.mxu0 0.0
    %1635 = vmatprep.subr.mxu0 0.0
    %1636 = vmatpush1.msra.mxu0 0.0
    %1637 = vmatprep.subr.mxu0 0.0
    %1638 = vmatpush1.msra.mxu0 0.0
    %1639 = vmatprep.subr.mxu0 0.0
    %1640 = vmatpush1.msra.mxu0 0.0
    %1641 = vmatprep.subr.mxu0 0.0
    %1642 = vmatpush1.msra.mxu0 0.0
    %1643 = vmatprep.subr.mxu0 0.0
    %1644 = vmatpush1.msra.mxu0 0.0
    %1645 = vmatprep.subr.mxu0 0.0
    %1646 = vmatpush1.msra.mxu0 0.0
    %1647 = vmatprep.subr.mxu0 0.0
    %1648 = vmatpush1.msra.mxu0 0.0
    %1649 = vmatprep.subr.mxu0 0.0
    %1650 = vmatpush1.msra.mxu0 0.0
    %1651 = vmatprep.subr.mxu0 0.0
    %1652 = vmatpush1.msra.mxu0 0.0
    %1653 = vmatprep.subr.mxu0 0.0
    %1654 = vmatpush1.msra.mxu0 0.0
    %1655 = vmatprep.mubr.f32.mxu0 0.0
    %1656 = vmatmul.mubr.f32.gmra.mrb[0].mxu0 %v1589
    %v1657 = vpop.f32.mrb[0].mxu0
    %v1658 = vadd.f32 0.0, %v1657
    %v1659 = vpop.f32.mrb[0].mxu0
    %1660 = vdwg.mxu0
    %v1661 = vadd.f32 %v1578, %v1658
    %s1662 = scalar_lea.vmem [#allocation3], 832
    %v1663 = vld [vmem:[%s1662] sm:$0xff]
    %v1664 = vld [vmem:[%s1662 + $0x8] sm:$0xff]
    %v1665 = vld [vmem:[%s1662 + $0x10] sm:$0xff]
    %v1666 = vld [vmem:[%s1662 + $0x18] sm:$0xff]
    %v1667 = vld [vmem:[%s1662 + $0x20] sm:$0xff]
    %v1668 = vld [vmem:[%s1662 + $0x28] sm:$0xff]
    %v1669 = vld [vmem:[%s1662 + $0x30] sm:$0xff]
    %v1670 = vld [vmem:[%s1662 + $0x38] sm:$0xff]
    %v1671 = vrot.slane %v574, 2
    %v1672 = vsel %vm591, %v1671, 0
    %1674 = vmatprep.subr.mxu0 0.0
    %1675 = vmatpush1.msra.mxu0 %v1663
    %1676 = vmatprep.subr.mxu0 0.0
    %1677 = vmatpush1.msra.mxu0 %v1664
    %1678 = vmatprep.subr.mxu0 0.0
    %1679 = vmatpush1.msra.mxu0 %v1665
    %1680 = vmatprep.subr.mxu0 0.0
    %1681 = vmatpush1.msra.mxu0 %v1666
    %1682 = vmatprep.subr.mxu0 0.0
    %1683 = vmatpush1.msra.mxu0 %v1667
    %1684 = vmatprep.subr.mxu0 0.0
    %1685 = vmatpush1.msra.mxu0 %v1668
    %1686 = vmatprep.subr.mxu0 0.0
    %1687 = vmatpush1.msra.mxu0 %v1669
    %1688 = vmatprep.subr.mxu0 0.0
    %1689 = vmatpush1.msra.mxu0 %v1670
    %1690 = vmatprep.subr.mxu0 0.0
    %1691 = vmatpush1.msra.mxu0 0.0
    %1692 = vmatprep.subr.mxu0 0.0
    %1693 = vmatpush1.msra.mxu0 0.0
    %1694 = vmatprep.subr.mxu0 0.0
    %1695 = vmatpush1.msra.mxu0 0.0
    %1696 = vmatprep.subr.mxu0 0.0
    %1697 = vmatpush1.msra.mxu0 0.0
    %1698 = vmatprep.subr.mxu0 0.0
    %1699 = vmatpush1.msra.mxu0 0.0
    %1700 = vmatprep.subr.mxu0 0.0
    %1701 = vmatpush1.msra.mxu0 0.0
    %1702 = vmatprep.subr.mxu0 0.0
    %1703 = vmatpush1.msra.mxu0 0.0
    %1704 = vmatprep.subr.mxu0 0.0
    %1705 = vmatpush1.msra.mxu0 0.0
    %1706 = vmatprep.subr.mxu0 0.0
    %1707 = vmatpush1.msra.mxu0 0.0
    %1708 = vmatprep.subr.mxu0 0.0
    %1709 = vmatpush1.msra.mxu0 0.0
    %1710 = vmatprep.subr.mxu0 0.0
    %1711 = vmatpush1.msra.mxu0 0.0
    %1712 = vmatprep.subr.mxu0 0.0
    %1713 = vmatpush1.msra.mxu0 0.0
    %1714 = vmatprep.subr.mxu0 0.0
    %1715 = vmatpush1.msra.mxu0 0.0
    %1716 = vmatprep.subr.mxu0 0.0
    %1717 = vmatpush1.msra.mxu0 0.0
    %1718 = vmatprep.subr.mxu0 0.0
    %1719 = vmatpush1.msra.mxu0 0.0
    %1720 = vmatprep.subr.mxu0 0.0
    %1721 = vmatpush1.msra.mxu0 0.0
    %1722 = vmatprep.subr.mxu0 0.0
    %1723 = vmatpush1.msra.mxu0 0.0
    %1724 = vmatprep.subr.mxu0 0.0
    %1725 = vmatpush1.msra.mxu0 0.0
    %1726 = vmatprep.subr.mxu0 0.0
    %1727 = vmatpush1.msra.mxu0 0.0
    %1728 = vmatprep.subr.mxu0 0.0
    %1729 = vmatpush1.msra.mxu0 0.0
    %1730 = vmatprep.subr.mxu0 0.0
    %1731 = vmatpush1.msra.mxu0 0.0
    %1732 = vmatprep.subr.mxu0 0.0
    %1733 = vmatpush1.msra.mxu0 0.0
    %1734 = vmatprep.subr.mxu0 0.0
    %1735 = vmatpush1.msra.mxu0 0.0
    %1736 = vmatprep.subr.mxu0 0.0
    %1737 = vmatpush1.msra.mxu0 0.0
    %1738 = vmatprep.mubr.f32.mxu0 0.0
    %1739 = vmatmul.mubr.f32.gmra.mrb[0].mxu0 %v1672
    %v1740 = vpop.f32.mrb[0].mxu0
    %v1741 = vadd.f32 0.0, %v1740
    %v1742 = vpop.f32.mrb[0].mxu0
    %1743 = vdwg.mxu0
    %v1744 = vadd.f32 %v1661, %v1741
    %s1745 = scalar_lea.vmem [#allocation3], 896
    %v1746 = vld [vmem:[%s1745] sm:$0xff]
    %v1747 = vld [vmem:[%s1745 + $0x8] sm:$0xff]
    %v1748 = vld [vmem:[%s1745 + $0x10] sm:$0xff]
    %v1749 = vld [vmem:[%s1745 + $0x18] sm:$0xff]
    %v1750 = vld [vmem:[%s1745 + $0x20] sm:$0xff]
    %v1751 = vld [vmem:[%s1745 + $0x28] sm:$0xff]
    %v1752 = vld [vmem:[%s1745 + $0x30] sm:$0xff]
    %v1753 = vld [vmem:[%s1745 + $0x38] sm:$0xff]
    %v1754 = vrot.slane %v574, 4
    %v1755 = vsel %vm591, %v1754, 0
    %1757 = vmatprep.subr.mxu0 0.0
    %1758 = vmatpush1.msra.mxu0 %v1746
    %1759 = vmatprep.subr.mxu0 0.0
    %1760 = vmatpush1.msra.mxu0 %v1747
    %1761 = vmatprep.subr.mxu0 0.0
    %1762 = vmatpush1.msra.mxu0 %v1748
    %1763 = vmatprep.subr.mxu0 0.0
    %1764 = vmatpush1.msra.mxu0 %v1749
    %1765 = vmatprep.subr.mxu0 0.0
    %1766 = vmatpush1.msra.mxu0 %v1750
    %1767 = vmatprep.subr.mxu0 0.0
    %1768 = vmatpush1.msra.mxu0 %v1751
    %1769 = vmatprep.subr.mxu0 0.0
    %1770 = vmatpush1.msra.mxu0 %v1752
    %1771 = vmatprep.subr.mxu0 0.0
    %1772 = vmatpush1.msra.mxu0 %v1753
    %1773 = vmatprep.subr.mxu0 0.0
    %1774 = vmatpush1.msra.mxu0 0.0
    %1775 = vmatprep.subr.mxu0 0.0
    %1776 = vmatpush1.msra.mxu0 0.0
    %1777 = vmatprep.subr.mxu0 0.0
    %1778 = vmatpush1.msra.mxu0 0.0
    %1779 = vmatprep.subr.mxu0 0.0
    %1780 = vmatpush1.msra.mxu0 0.0
    %1781 = vmatprep.subr.mxu0 0.0
    %1782 = vmatpush1.msra.mxu0 0.0
    %1783 = vmatprep.subr.mxu0 0.0
    %1784 = vmatpush1.msra.mxu0 0.0
    %1785 = vmatprep.subr.mxu0 0.0
    %1786 = vmatpush1.msra.mxu0 0.0
    %1787 = vmatprep.subr.mxu0 0.0
    %1788 = vmatpush1.msra.mxu0 0.0
    %1789 = vmatprep.subr.mxu0 0.0
    %1790 = vmatpush1.msra.mxu0 0.0
    %1791 = vmatprep.subr.mxu0 0.0
    %1792 = vmatpush1.msra.mxu0 0.0
    %1793 = vmatprep.subr.mxu0 0.0
    %1794 = vmatpush1.msra.mxu0 0.0
    %1795 = vmatprep.subr.mxu0 0.0
    %1796 = vmatpush1.msra.mxu0 0.0
    %1797 = vmatprep.subr.mxu0 0.0
    %1798 = vmatpush1.msra.mxu0 0.0
    %1799 = vmatprep.subr.mxu0 0.0
    %1800 = vmatpush1.msra.mxu0 0.0
    %1801 = vmatprep.subr.mxu0 0.0
    %1802 = vmatpush1.msra.mxu0 0.0
    %1803 = vmatprep.subr.mxu0 0.0
    %1804 = vmatpush1.msra.mxu0 0.0
    %1805 = vmatprep.subr.mxu0 0.0
    %1806 = vmatpush1.msra.mxu0 0.0
    %1807 = vmatprep.subr.mxu0 0.0
    %1808 = vmatpush1.msra.mxu0 0.0
    %1809 = vmatprep.subr.mxu0 0.0
    %1810 = vmatpush1.msra.mxu0 0.0
    %1811 = vmatprep.subr.mxu0 0.0
    %1812 = vmatpush1.msra.mxu0 0.0
    %1813 = vmatprep.subr.mxu0 0.0
    %1814 = vmatpush1.msra.mxu0 0.0
    %1815 = vmatprep.subr.mxu0 0.0
    %1816 = vmatpush1.msra.mxu0 0.0
    %1817 = vmatprep.subr.mxu0 0.0
    %1818 = vmatpush1.msra.mxu0 0.0
    %1819 = vmatprep.subr.mxu0 0.0
    %1820 = vmatpush1.msra.mxu0 0.0
    %1821 = vmatprep.mubr.f32.mxu0 0.0
    %1822 = vmatmul.mubr.f32.gmra.mrb[0].mxu0 %v1755
    %v1823 = vpop.f32.mrb[0].mxu0
    %v1824 = vadd.f32 0.0, %v1823
    %v1825 = vpop.f32.mrb[0].mxu0
    %1826 = vdwg.mxu0
    %v1827 = vadd.f32 %v1744, %v1824
    %s1828 = scalar_lea.vmem [#allocation3], 960
    %v1829 = vld [vmem:[%s1828] sm:$0xff]
    %v1830 = vld [vmem:[%s1828 + $0x8] sm:$0xff]
    %v1831 = vld [vmem:[%s1828 + $0x10] sm:$0xff]
    %v1832 = vld [vmem:[%s1828 + $0x18] sm:$0xff]
    %v1833 = vld [vmem:[%s1828 + $0x20] sm:$0xff]
    %v1834 = vld [vmem:[%s1828 + $0x28] sm:$0xff]
    %v1835 = vld [vmem:[%s1828 + $0x30] sm:$0xff]
    %v1836 = vld [vmem:[%s1828 + $0x38] sm:$0xff]
    %v1837 = vrot.slane %v574, 6
    %v1838 = vsel %vm591, %v1837, 0
    %1840 = vmatprep.subr.mxu0 0.0
    %1841 = vmatpush1.msra.mxu0 %v1829
    %1842 = vmatprep.subr.mxu0 0.0
    %1843 = vmatpush1.msra.mxu0 %v1830
    %1844 = vmatprep.subr.mxu0 0.0
    %1845 = vmatpush1.msra.mxu0 %v1831
    %1846 = vmatprep.subr.mxu0 0.0
    %1847 = vmatpush1.msra.mxu0 %v1832
    %1848 = vmatprep.subr.mxu0 0.0
    %1849 = vmatpush1.msra.mxu0 %v1833
    %1850 = vmatprep.subr.mxu0 0.0
    %1851 = vmatpush1.msra.mxu0 %v1834
    %1852 = vmatprep.subr.mxu0 0.0
    %1853 = vmatpush1.msra.mxu0 %v1835
    %1854 = vmatprep.subr.mxu0 0.0
    %1855 = vmatpush1.msra.mxu0 %v1836
    %1856 = vmatprep.subr.mxu0 0.0
    %1857 = vmatpush1.msra.mxu0 0.0
    %1858 = vmatprep.subr.mxu0 0.0
    %1859 = vmatpush1.msra.mxu0 0.0
    %1860 = vmatprep.subr.mxu0 0.0
    %1861 = vmatpush1.msra.mxu0 0.0
    %1862 = vmatprep.subr.mxu0 0.0
    %1863 = vmatpush1.msra.mxu0 0.0
    %1864 = vmatprep.subr.mxu0 0.0
    %1865 = vmatpush1.msra.mxu0 0.0
    %1866 = vmatprep.subr.mxu0 0.0
    %1867 = vmatpush1.msra.mxu0 0.0
    %1868 = vmatprep.subr.mxu0 0.0
    %1869 = vmatpush1.msra.mxu0 0.0
    %1870 = vmatprep.subr.mxu0 0.0
    %1871 = vmatpush1.msra.mxu0 0.0
    %1872 = vmatprep.subr.mxu0 0.0
    %1873 = vmatpush1.msra.mxu0 0.0
    %1874 = vmatprep.subr.mxu0 0.0
    %1875 = vmatpush1.msra.mxu0 0.0
    %1876 = vmatprep.subr.mxu0 0.0
    %1877 = vmatpush1.msra.mxu0 0.0
    %1878 = vmatprep.subr.mxu0 0.0
    %1879 = vmatpush1.msra.mxu0 0.0
    %1880 = vmatprep.subr.mxu0 0.0
    %1881 = vmatpush1.msra.mxu0 0.0
    %1882 = vmatprep.subr.mxu0 0.0
    %1883 = vmatpush1.msra.mxu0 0.0
    %1884 = vmatprep.subr.mxu0 0.0
    %1885 = vmatpush1.msra.mxu0 0.0
    %1886 = vmatprep.subr.mxu0 0.0
    %1887 = vmatpush1.msra.mxu0 0.0
    %1888 = vmatprep.subr.mxu0 0.0
    %1889 = vmatpush1.msra.mxu0 0.0
    %1890 = vmatprep.subr.mxu0 0.0
    %1891 = vmatpush1.msra.mxu0 0.0
    %1892 = vmatprep.subr.mxu0 0.0
    %1893 = vmatpush1.msra.mxu0 0.0
    %1894 = vmatprep.subr.mxu0 0.0
    %1895 = vmatpush1.msra.mxu0 0.0
    %1896 = vmatprep.subr.mxu0 0.0
    %1897 = vmatpush1.msra.mxu0 0.0
    %1898 = vmatprep.subr.mxu0 0.0
    %1899 = vmatpush1.msra.mxu0 0.0
    %1900 = vmatprep.subr.mxu0 0.0
    %1901 = vmatpush1.msra.mxu0 0.0
    %1902 = vmatprep.subr.mxu0 0.0
    %1903 = vmatpush1.msra.mxu0 0.0
    %1904 = vmatprep.mubr.f32.mxu0 0.0
    %1905 = vmatmul.mubr.f32.gmra.mrb[0].mxu0 %v1838
    %v1906 = vpop.f32.mrb[0].mxu0
    %v1907 = vadd.f32 0.0, %v1906
    %v1908 = vpop.f32.mrb[0].mxu0
    %1909 = vdwg.mxu0
    %v1910 = vadd.f32 %v1827, %v1907
    %v1911 = vmax.f32 %v1910, 0.0
    %v1912 = vld [vmem:[%s11] sm:$0x1]
    %v1914 = vlaneseq
    %v1915 = vshrl.u32 %v1914, 7
    %v1916 = vsub.s32 0, %v1915
    %v1917 = vrot.slane %v1912, %v1916
    %v1919 = vmul.f32 %v1911, %v1917
    %v1920 = vld [vmem:[%s12] sm:$0x1]
    %v1922 = vlaneseq
    %v1923 = vshrl.u32 %v1922, 7
    %v1924 = vsub.s32 0, %v1923
    %v1925 = vrot.slane %v1920, %v1924
    %v1927 = vadd.f32 %v1919, %v1925
    %v1928 = vld [vmem:[%s13] sm:$0xff]
    %v1929 = vld [vmem:[%s13 + $0x8] sm:$0xff]
    %v1930 = vld [vmem:[%s13 + $0x10] sm:$0xff]
    %v1931 = vld [vmem:[%s13 + $0x18] sm:$0xff]
    %v1932 = vld [vmem:[%s13 + $0x20] sm:$0xff]
    %v1933 = vld [vmem:[%s13 + $0x28] sm:$0xff]
    %v1934 = vld [vmem:[%s13 + $0x30] sm:$0xff]
    %v1935 = vld [vmem:[%s13 + $0x38] sm:$0xff]
    %v1936 = vld [vmem:[%s13 + $0x40] sm:$0xff]
    %v1937 = vld [vmem:[%s13 + $0x48] sm:$0xff]
    %v1938 = vld [vmem:[%s13 + $0x50] sm:$0xff]
    %v1939 = vld [vmem:[%s13 + $0x58] sm:$0xff]
    %v1940 = vld [vmem:[%s13 + $0x60] sm:$0xff]
    %v1941 = vld [vmem:[%s13 + $0x68] sm:$0xff]
    %v1942 = vld [vmem:[%s13 + $0x70] sm:$0xff]
    %v1943 = vld [vmem:[%s13 + $0x78] sm:$0xff]
    %v1944 = vld [vmem:[#allocation2] sm:$0x1]
    %v1946 = vlaneseq
    %v1947 = vshrl.u32 %v1946, 7
    %v1948 = vsub.s32 0, %v1947
    %v1949 = vrot.slane %v1944, %v1948
    %1951 = vmatprep.subr.mxu0 0.0
    %1952 = vmatpush1.msra.mxu0 %v1928
    %1953 = vmatprep.subr.mxu0 0.0
    %1954 = vmatpush1.msra.mxu0 %v1929
    %1955 = vmatprep.subr.mxu0 0.0
    %1956 = vmatpush1.msra.mxu0 %v1930
    %1957 = vmatprep.subr.mxu0 0.0
    %1958 = vmatpush1.msra.mxu0 %v1931
    %1959 = vmatprep.subr.mxu0 0.0
    %1960 = vmatpush1.msra.mxu0 %v1932
    %1961 = vmatprep.subr.mxu0 0.0
    %1962 = vmatpush1.msra.mxu0 %v1933
    %1963 = vmatprep.subr.mxu0 0.0
    %1964 = vmatpush1.msra.mxu0 %v1934
    %1965 = vmatprep.subr.mxu0 0.0
    %1966 = vmatpush1.msra.mxu0 %v1935
    %1967 = vmatprep.subr.mxu0 0.0
    %1968 = vmatpush1.msra.mxu0 %v1936
    %1969 = vmatprep.subr.mxu0 0.0
    %1970 = vmatpush1.msra.mxu0 %v1937
    %1971 = vmatprep.subr.mxu0 0.0
    %1972 = vmatpush1.msra.mxu0 %v1938
    %1973 = vmatprep.subr.mxu0 0.0
    %1974 = vmatpush1.msra.mxu0 %v1939
    %1975 = vmatprep.subr.mxu0 0.0
    %1976 = vmatpush1.msra.mxu0 %v1940
    %1977 = vmatprep.subr.mxu0 0.0
    %1978 = vmatpush1.msra.mxu0 %v1941
    %1979 = vmatprep.subr.mxu0 0.0
    %1980 = vmatpush1.msra.mxu0 %v1942
    %1981 = vmatprep.subr.mxu0 0.0
    %1982 = vmatpush1.msra.mxu0 %v1943
    %1983 = vmatprep.subr.mxu0 0.0
    %1984 = vmatpush1.msra.mxu0 0.0
    %1985 = vmatprep.subr.mxu0 0.0
    %1986 = vmatpush1.msra.mxu0 0.0
    %1987 = vmatprep.subr.mxu0 0.0
    %1988 = vmatpush1.msra.mxu0 0.0
    %1989 = vmatprep.subr.mxu0 0.0
    %1990 = vmatpush1.msra.mxu0 0.0
    %1991 = vmatprep.subr.mxu0 0.0
    %1992 = vmatpush1.msra.mxu0 0.0
    %1993 = vmatprep.subr.mxu0 0.0
    %1994 = vmatpush1.msra.mxu0 0.0
    %1995 = vmatprep.subr.mxu0 0.0
    %1996 = vmatpush1.msra.mxu0 0.0
    %1997 = vmatprep.subr.mxu0 0.0
    %1998 = vmatpush1.msra.mxu0 0.0
    %1999 = vmatprep.subr.mxu0 0.0
    %2000 = vmatpush1.msra.mxu0 0.0
    %2001 = vmatprep.subr.mxu0 0.0
    %2002 = vmatpush1.msra.mxu0 0.0
    %2003 = vmatprep.subr.mxu0 0.0
    %2004 = vmatpush1.msra.mxu0 0.0
    %2005 = vmatprep.subr.mxu0 0.0
    %2006 = vmatpush1.msra.mxu0 0.0
    %2007 = vmatprep.subr.mxu0 0.0
    %2008 = vmatpush1.msra.mxu0 0.0
    %2009 = vmatprep.subr.mxu0 0.0
    %2010 = vmatpush1.msra.mxu0 0.0
    %2011 = vmatprep.subr.mxu0 0.0
    %2012 = vmatpush1.msra.mxu0 0.0
    %2013 = vmatprep.subr.mxu0 0.0
    %2014 = vmatpush1.msra.mxu0 0.0
    %2015 = vmatprep.mubr.f32.mxu0 0.0
    %2016 = vmatmul.mubr.f32.gmra.mrb[0].mxu0 %v1927
    %v2017 = vpop.f32.mrb[0].mxu0
    %v2018 = vadd.f32 %v1949, %v2017
    %v2019 = vpop.f32.mrb[0].mxu0
    %2020 = vdwg.mxu0
    %vm2021 = vcmask 1024
    %2022 = vst.msk [vmem:[%s15] sm:$0x3] %vm2021, %v2018
    // Predicated region
    $region66: #{tpu_custom_call.1} parent=1 // pred_check
      _
    $region67: #{tpu_custom_call.1} parent=1 // pred_check_branch
      %2024 = sbr.rel (0) target = $region69
    $region68: #{tpu_custom_call.1} parent=1 // pred_region
      _
    $region69: #{tpu_custom_call.1} parent=1 // pred_fallthru
      _
    // Predicated region
    $region70: #{tpu_custom_call.1} parent=1 // pred_check
      _
    $region71: #{tpu_custom_call.1} parent=1 // pred_check_branch
      %2026 = sbr.rel (0) target = $region73
    $region72: #{tpu_custom_call.1} parent=1 // pred_region
      _
    $region73: #{tpu_custom_call.1} parent=1 // pred_fallthru
      _
    %2027 = vsyncpa [#allocation4], 1

</llo_original>
